<compile_context>
chip_gen: v7x
topology: tpu7x:2x2x1
jax: 0.10.0
libtpu: 0.0.40
codegen_flags: <defaults>
</compile_context>

<pallas_src>
import functools

import jax
import jax.numpy as jnp
from jax.experimental import pallas as pl
from jax.experimental.pallas import tpu as pltpu

LANE = 128                     # TPU lane width (last-dim tile)
SUBLANE = 8
VMEM_LIMIT_BYTES = 32 * 1024 * 1024   # explicit scoped-VMEM budget, safe on v5e/v6e/v7x


def _round_up(x, m):
    return (x + m - 1) // m * m


def _pad2(x, rows, cols):
    return jnp.pad(x, ((0, rows - x.shape[0]), (0, cols - x.shape[1])))


# ---------------------------------------------------------------------------
# Kernel 1: row-tiled feature transform  XW  (bf16 x bf16 -> f32 acc -> bf16)
# ---------------------------------------------------------------------------
def _xw_kernel(x_ref, w_ref, o_ref):
    o_ref[...] = jnp.dot(x_ref[...], w_ref[...],
                         preferred_element_type=jnp.float32).astype(o_ref.dtype)


def _feature_transform(x, w, *, tile_m):
    n, d_in = x.shape
    d_out = w.shape[1]
    return pl.pallas_call(
        _xw_kernel,
        out_shape=jax.ShapeDtypeStruct((n, d_out), jnp.bfloat16),
        grid_spec=pltpu.PrefetchScalarGridSpec(
            num_scalar_prefetch=0,
            grid=(n // tile_m,),
            in_specs=[pl.BlockSpec((tile_m, d_in), lambda i: (i, 0)),
                      pl.BlockSpec((d_in, d_out), lambda i: (0, 0))],   # resident W
            out_specs=pl.BlockSpec((tile_m, d_out), lambda i: (i, 0))),
        compiler_params=pltpu.CompilerParams(
            dimension_semantics=("parallel",),
            vmem_limit_bytes=VMEM_LIMIT_BYTES),
    )(x, w)


# ---------------------------------------------------------------------------
# Kernel 2: graph aggregation  H = [relu]( Â @ XW + b )
#   grid = (row blocks, k blocks).  Â streamed in bf16 (tile_m, tile_k) tiles
#   (double-buffered DMA overlapped with MXU), XW resident in VMEM as a full
#   (Np, D) slab, f32 accumulator scratch, pl.when init/finalize over k.
# ---------------------------------------------------------------------------
def _aggregate_kernel(adj_ref, xw_ref, b_ref, o_ref, acc_ref, *, tile_k, relu):
    k = pl.program_id(1)

    @pl.when(k == 0)
    def _init():
        acc_ref[...] = jnp.zeros_like(acc_ref)

    off = pl.multiple_of(k * tile_k, tile_k)
    acc_ref[...] += jnp.dot(adj_ref[...], xw_ref[pl.ds(off, tile_k), :],
                            preferred_element_type=jnp.float32)

    @pl.when(k == pl.num_programs(1) - 1)
    def _finalize():
        h = acc_ref[...] + b_ref[...]        # f32 epilogue: bias (+ relu)
        if relu:
            h = jnp.maximum(h, 0.0)
        o_ref[...] = h.astype(o_ref.dtype)


def _graph_aggregate(adj, xw, b, *, relu, tile_m, tile_k):
    n = adj.shape[0]
    d = xw.shape[1]
    flops = 2 * n * n * d
    bytes_accessed = adj.size * 2 + xw.size * 2 + n * d * 2 + b.size * 4
    return pl.pallas_call(
        functools.partial(_aggregate_kernel, tile_k=tile_k, relu=relu),
        out_shape=jax.ShapeDtypeStruct((n, d), jnp.bfloat16),
        grid_spec=pltpu.PrefetchScalarGridSpec(
            num_scalar_prefetch=0,
            grid=(n // tile_m, n // tile_k),
            in_specs=[pl.BlockSpec((tile_m, tile_k), lambda i, k: (i, k)),  # Â tiles
                      pl.BlockSpec((n, d), lambda i, k: (0, 0)),            # resident XW slab
                      pl.BlockSpec((1, d), lambda i, k: (0, 0))],           # resident bias
            out_specs=pl.BlockSpec((tile_m, d), lambda i, k: (i, 0)),
            scratch_shapes=[pltpu.VMEM((tile_m, d), jnp.float32)]),
        compiler_params=pltpu.CompilerParams(
            dimension_semantics=("parallel", "arbitrary"),
            vmem_limit_bytes=VMEM_LIMIT_BYTES),
        cost_estimate=pl.CostEstimate(flops=flops, transcendentals=0,
                                      bytes_accessed=bytes_accessed),
    )(adj, xw, b)


# ---------------------------------------------------------------------------
# Kernel 3: SumPooling + linear_1 + ReLU + linear_2 (fused head)
#   grid over node blocks; per-graph sums accumulated into a (Bp, D) f32
#   scratch via the one-hot membership matmul; MLP head runs at the last step.
# ---------------------------------------------------------------------------
def _pool_head_kernel(pool_ref, h_ref, w1_ref, b1_ref, w2_ref, b2_ref,
                      o_ref, acc_ref):
    k = pl.program_id(0)

    @pl.when(k == 0)
    def _init():
        acc_ref[...] = jnp.zeros_like(acc_ref)

    acc_ref[...] += jnp.dot(pool_ref[...], h_ref[...],
                            preferred_element_type=jnp.float32)

    @pl.when(k == pl.num_programs(0) - 1)
    def _finalize():
        p = acc_ref[...]                                           # [Bp, D] f32
        z = jnp.dot(p.astype(jnp.bfloat16), w1_ref[...],
                    preferred_element_type=jnp.float32) + b1_ref[...]
        z = jnp.maximum(z, 0.0)
        out = jnp.dot(z.astype(jnp.bfloat16), w2_ref[...],
                      preferred_element_type=jnp.float32) + b2_ref[...]
        o_ref[...] = out.astype(o_ref.dtype)


def _pool_mlp_head(pool, h, w1, b1, w2, b2, *, tile_k):
    bp, n = pool.shape
    d_in = h.shape[1]
    d_hid = w1.shape[1]
    r = w2.shape[1]
    return pl.pallas_call(
        _pool_head_kernel,
        out_shape=jax.ShapeDtypeStruct((bp, r), jnp.float32),
        grid_spec=pltpu.PrefetchScalarGridSpec(
            num_scalar_prefetch=0,
            grid=(n // tile_k,),
            in_specs=[pl.BlockSpec((bp, tile_k), lambda k: (0, k)),
                      pl.BlockSpec((tile_k, d_in), lambda k: (k, 0)),
                      pl.BlockSpec((d_in, d_hid), lambda k: (0, 0)),
                      pl.BlockSpec((1, d_hid), lambda k: (0, 0)),
                      pl.BlockSpec((d_hid, r), lambda k: (0, 0)),
                      pl.BlockSpec((1, r), lambda k: (0, 0))],
            out_specs=pl.BlockSpec((bp, r), lambda k: (0, 0)),
            scratch_shapes=[pltpu.VMEM((bp, d_in), jnp.float32)]),
        compiler_params=pltpu.CompilerParams(
            dimension_semantics=("arbitrary",),
            vmem_limit_bytes=VMEM_LIMIT_BYTES),
    )(pool, h, w1, b1, w2, b2)


# ---------------------------------------------------------------------------
# Full forward (padding + dtype handling + the three-stage Pallas pipeline)
# ---------------------------------------------------------------------------
def seal_gcn_forward(x0, adj, wg0, bg0, wg1, bg1, pool, w1, b1, w2, b2,
                     *, tile_m=128, tile_k=128):
    n_nodes, cat_dim = x0.shape
    gcn_dim = wg0.shape[1]
    embed_dim = w1.shape[1]
    num_rel = w2.shape[1]
    n_graphs = pool.shape[0]

    np_ = _round_up(n_nodes, max(tile_m, tile_k))
    dc = _round_up(cat_dim, LANE)
    dg = _round_up(gcn_dim, LANE)
    de = _round_up(embed_dim, LANE)
    rp = _round_up(num_rel, LANE)
    bp = _round_up(n_graphs, SUBLANE)

    f32, bf16 = jnp.float32, jnp.bfloat16

    # Normalisation / padding happen in f32; streamed operands downcast to bf16.
    x0_p = _pad2(x0.astype(f32), np_, dc).astype(bf16)
    adj_p = _pad2(adj.astype(f32), np_, np_).astype(bf16)
    pool_p = _pad2(pool.astype(f32), bp, np_).astype(bf16)

    wg0_p = _pad2(wg0.astype(f32), dc, dg).astype(bf16)
    wg1_p = _pad2(wg1.astype(f32), dg, dg).astype(bf16)
    w1_p = _pad2(w1.astype(f32), dg, de).astype(bf16)
    w2_p = _pad2(w2.astype(f32), de, rp).astype(bf16)
    bg0_p = _pad2(bg0.astype(f32), 1, dg)
    bg1_p = _pad2(bg1.astype(f32), 1, dg)
    b1_p = _pad2(b1.astype(f32), 1, de)
    b2_p = _pad2(b2.astype(f32), 1, rp)

    # GraphConv 0:  h0 = relu( Â (X W0) + b0 )
    xw0 = _feature_transform(x0_p, wg0_p, tile_m=tile_m)
    h0 = _graph_aggregate(adj_p, xw0, bg0_p, relu=True,
                          tile_m=tile_m, tile_k=tile_k)
    # GraphConv 1 (last layer, no relu):  h1 = Â (h0 W1) + b1
    xw1 = _feature_transform(h0, wg1_p, tile_m=tile_m)
    h1 = _graph_aggregate(adj_p, xw1, bg1_p, relu=False,
                          tile_m=tile_m, tile_k=tile_k)
    # SumPooling + linear_1 + ReLU + linear_2
    out_p = _pool_mlp_head(pool_p, h1, w1_p, b1_p, w2_p, b2_p, tile_k=tile_k)
    return out_p[:n_graphs, :num_rel]


# ------------------------------ glue / setup --------------------------------
def normalized_adjacency(A):
    """DGL GraphConv norm='both' with degree clamp(min=1).  A[src, dst] = edge."""
    out_deg = jnp.maximum(A.sum(axis=1), 1.0)
    in_deg = jnp.maximum(A.sum(axis=0), 1.0)
    return (in_deg[:, None] ** -0.5) * A.T * (out_deg[None, :] ** -0.5)


if __name__ == "__main__":
    # ---- hyper-parameters (small, consistent with module __init__) ----
    num_ent, num_rel = 50, 5
    init_dim, gcn_dim, embed_dim = 16, 32, 32
    max_z = 10
    n_graphs, nodes_per_graph = 4, 50
    n_nodes = n_graphs * nodes_per_graph          # 200 nodes -> padded to 256
    cat_dim = 2 * init_dim                        # init_dim += init_dim in __init__

    key = jax.random.PRNGKey(0)
    keys = jax.random.split(key, 12)

    # ---- deterministic synthetic parameters (shapes from __init__) ----
    relu_gain = 2.0 ** 0.5
    init_embed = relu_gain * jax.random.normal(keys[0], (num_ent, init_dim), jnp.float32) \
        * (2.0 / (num_ent + init_dim)) ** 0.5      # xavier_normal with relu gain
    z_embedding = jax.random.normal(keys[1], (max_z, init_dim), jnp.float32)

    wg0 = jax.random.normal(keys[2], (cat_dim, gcn_dim), jnp.float32) * (1.0 / cat_dim) ** 0.5
    bg0 = 0.1 * jax.random.normal(keys[3], (1, gcn_dim), jnp.float32)
    wg1 = jax.random.normal(keys[4], (gcn_dim, gcn_dim), jnp.float32) * (1.0 / gcn_dim) ** 0.5
    bg1 = 0.1 * jax.random.normal(keys[5], (1, gcn_dim), jnp.float32)

    w1 = jax.random.normal(keys[6], (embed_dim, embed_dim), jnp.float32) * (1.0 / embed_dim) ** 0.5
    b1 = 0.05 * jax.random.normal(keys[7], (1, embed_dim), jnp.float32)
    w2 = jax.random.normal(keys[8], (embed_dim, num_rel), jnp.float32) * (1.0 / embed_dim) ** 0.5
    b2 = 0.05 * jax.random.normal(keys[9], (1, num_rel), jnp.float32)

    # ---- deterministic synthetic batched graph (block-diagonal adjacency) ----
    nid = jax.random.randint(keys[10], (n_nodes,), 0, num_ent)        # g.ndata[NID]
    z = jax.random.randint(keys[11], (n_nodes,), 0, max_z)            # structural labels
    graph_id = jnp.repeat(jnp.arange(n_graphs), nodes_per_graph)

    A_rand = (jax.random.uniform(keys[10], (n_nodes, n_nodes)) < 0.3).astype(jnp.float32)
    same_graph = (graph_id[:, None] == graph_id[None, :]).astype(jnp.float32)
    A = A_rand * same_graph                                           # A[src, dst]
    adj = normalized_adjacency(A)                                     # f32 Â

    pool = (jnp.arange(n_graphs)[:, None] == graph_id[None, :]).astype(jnp.float32)

    # ---- glue: embedding gathers + concat (data-dependent; stays in JAX) ----
    x_ent = jnp.take(init_embed, nid, axis=0)
    z_emb = jnp.take(z_embedding, z, axis=0)
    x0 = jnp.concatenate([x_ent, z_emb], axis=1)                      # [N, 2*init_dim]

    # ---- run the tiled Pallas pipeline ----
    fwd = jax.jit(seal_gcn_forward)
    out = fwd(x0, adj, wg0, bg0, wg1, bg1, pool, w1, b1, w2, b2)
    out = jax.block_until_ready(out)
    assert out.shape == (n_graphs, num_rel)

    # ---- f32 reference (eval mode, dropout = identity). Kernel streams bf16,
    #      so tolerances are loosened accordingly. ----
    h_ref = jnp.maximum(adj @ (x0 @ wg0) + bg0, 0.0)
    h_ref = adj @ (h_ref @ wg1) + bg1
    p_ref = pool @ h_ref
    p_ref = jnp.maximum(p_ref @ w1 + b1, 0.0)
    out_ref = p_ref @ w2 + b2
    assert jnp.allclose(out, out_ref, atol=1e-1, rtol=1e-1), \
        float(jnp.max(jnp.abs(out - out_ref)))

    print("KERNEL_OK")
</pallas_src>

<mosaic_0001>
module attributes {stable_mosaic.version = 11 : i64} {
  func.func @_xw_kernel(%arg0: i32, %arg1: memref<128x128xbf16, #tpu.memory_space<vmem>>, %arg2: memref<128x128xbf16, #tpu.memory_space<vmem>>, %arg3: memref<128x128xbf16, #tpu.memory_space<vmem>>) attributes {dimension_semantics = [#tpu.dimension_semantics<parallel>], iteration_bounds = array<i64: 2>, scalar_prefetch = 0 : i64, scratch_operands = 0 : i64, tpu.core_type = #tpu.core_type<tc>, window_params = [{transform_indices = @transform_0, window_bounds = array<i64: 128, 128>}, {pipeline_mode = #tpu.pipeline_mode<synchronous>, transform_indices = @transform_1, window_bounds = array<i64: 128, 128>}, {transform_indices = @transform_2, window_bounds = array<i64: 128, 128>}]} {
    %c0 = arith.constant 0 : index
    %c0_0 = arith.constant 0 : index
    %0 = vector.load %arg1[%c0, %c0_0] : memref<128x128xbf16, #tpu.memory_space<vmem>>, vector<128x128xbf16>
    %c0_1 = arith.constant 0 : index
    %c0_2 = arith.constant 0 : index
    %1 = vector.load %arg2[%c0_1, %c0_2] : memref<128x128xbf16, #tpu.memory_space<vmem>>, vector<128x128xbf16>
    %cst = arith.constant dense<0.000000e+00> : vector<128x128xf32>
    %2 = tpu.matmul %0, %1, %cst {dimension_numbers = #tpu.dot_dimension_numbers<[1], [0], [0], [1], [0, 0, 1, 1], [], []>} : vector<128x128xbf16>, vector<128x128xbf16>, vector<128x128xf32> -> vector<128x128xf32>
    %3 = arith.truncf %2 : vector<128x128xf32> to vector<128x128xbf16>
    %c0_3 = arith.constant 0 : index
    %c0_4 = arith.constant 0 : index
    %4 = vector.load %arg3[%c0_3, %c0_4] : memref<128x128xbf16, #tpu.memory_space<vmem>>, vector<128x128xbf16>
    tpu.vector_store %arg3[%c0_3, %c0_4], %3 {strides = array<i32>} : memref<128x128xbf16, #tpu.memory_space<vmem>>, vector<128x128xbf16>,
    return
  }
  func.func @transform_0(%arg0: i32) -> (i32, i32) {
    %c0_i32 = arith.constant 0 : i32
    %c0_i32_0 = arith.constant 0 : i32
    return %arg0, %c0_i32 : i32, i32
  }
  func.func @transform_1(%arg0: i32) -> (i32, i32) {
    %c0_i32 = arith.constant 0 : i32
    %c0_i32_0 = arith.constant 0 : i32
    %c0_i32_1 = arith.constant 0 : i32
    return %c0_i32, %c0_i32_0 : i32, i32
  }
  func.func @transform_2(%arg0: i32) -> (i32, i32) {
    %c0_i32 = arith.constant 0 : i32
    %c0_i32_0 = arith.constant 0 : i32
    return %arg0, %c0_i32 : i32, i32
  }
}

module attributes {stable_mosaic.version = 11 : i64} {
  func.func @_aggregate_kernel(%arg0: i32, %arg1: i32, %arg2: memref<128x128xbf16, #tpu.memory_space<vmem>>, %arg3: memref<256x128xbf16, #tpu.memory_space<vmem>>, %arg4: memref<1x128xf32, #tpu.memory_space<vmem>>, %arg5: memref<128x128xbf16, #tpu.memory_space<vmem>>, %arg6: memref<128x128xf32, #tpu.memory_space<vmem>>) attributes {dimension_semantics = [#tpu.dimension_semantics<parallel>, #tpu.dimension_semantics<arbitrary>], iteration_bounds = array<i64: 2, 2>, scalar_prefetch = 0 : i64, scratch_operands = 1 : i64, tpu.core_type = #tpu.core_type<tc>, window_params = [{transform_indices = @transform_0, window_bounds = array<i64: 128, 128>}, {pipeline_mode = #tpu.pipeline_mode<synchronous>, transform_indices = @transform_1, window_bounds = array<i64: 256, 128>}, {pipeline_mode = #tpu.pipeline_mode<synchronous>, transform_indices = @transform_2, window_bounds = array<i64: 1, 128>}, {transform_indices = @transform_3, window_bounds = array<i64: 128, 128>}]} {
    %c0_i32 = arith.constant 0 : i32
    %0 = arith.cmpi eq, %arg1, %c0_i32 : i32
    %1 = arith.extui %0 : i1 to i32
    %c0_i32_0 = arith.constant 0 : i32
    %2 = arith.cmpi ne, %1, %c0_i32_0 : i32
    scf.if %2 {
      %cst_8 = arith.constant 0.000000e+00 : f32
      %15 = vector.broadcast %cst_8 : f32 to vector<128x128xf32>
      %c0_9 = arith.constant 0 : index
      %c0_10 = arith.constant 0 : index
      %16 = vector.load %arg6[%c0_9, %c0_10] : memref<128x128xf32, #tpu.memory_space<vmem>>, vector<128x128xf32>
      tpu.vector_store %arg6[%c0_9, %c0_10], %15 {strides = array<i32>} : memref<128x128xf32, #tpu.memory_space<vmem>>, vector<128x128xf32>,
    } else {
    }
    %c128_i32 = arith.constant 128 : i32
    %3 = arith.muli %arg1, %c128_i32 : i32
    %4 = tpu.assume_multiple %3, 128 : i32
    %c0 = arith.constant 0 : index
    %c0_1 = arith.constant 0 : index
    %5 = vector.load %arg6[%c0, %c0_1] : memref<128x128xf32, #tpu.memory_space<vmem>>, vector<128x128xf32>
    %c0_2 = arith.constant 0 : index
    %c0_3 = arith.constant 0 : index
    %6 = vector.load %arg2[%c0_2, %c0_3] : memref<128x128xbf16, #tpu.memory_space<vmem>>, vector<128x128xbf16>
    %7 = arith.index_cast %4 : i32 to index
    %c0_4 = arith.constant 0 : index
    %8 = vector.load %arg3[%7, %c0_4] : memref<256x128xbf16, #tpu.memory_space<vmem>>, vector<128x128xbf16>
    %cst = arith.constant dense<0.000000e+00> : vector<128x128xf32>
    %9 = tpu.matmul %6, %8, %cst {dimension_numbers = #tpu.dot_dimension_numbers<[1], [0], [0], [1], [0, 0, 1, 1], [], []>} : vector<128x128xbf16>, vector<128x128xbf16>, vector<128x128xf32> -> vector<128x128xf32>
    %10 = arith.addf %5, %9 : vector<128x128xf32>
    %c0_5 = arith.constant 0 : index
    %c0_6 = arith.constant 0 : index
    %11 = vector.load %arg6[%c0_5, %c0_6] : memref<128x128xf32, #tpu.memory_space<vmem>>, vector<128x128xf32>
    tpu.vector_store %arg6[%c0_5, %c0_6], %10 {strides = array<i32>} : memref<128x128xf32, #tpu.memory_space<vmem>>, vector<128x128xf32>,
    %c1_i32 = arith.constant 1 : i32
    %12 = arith.cmpi eq, %arg1, %c1_i32 : i32
    %13 = arith.extui %12 : i1 to i32
    %c0_i32_7 = arith.constant 0 : i32
    %14 = arith.cmpi ne, %13, %c0_i32_7 : i32
    scf.if %14 {
      %c0_8 = arith.constant 0 : index
      %c0_9 = arith.constant 0 : index
      %15 = vector.load %arg6[%c0_8, %c0_9] : memref<128x128xf32, #tpu.memory_space<vmem>>, vector<128x128xf32>
      %c0_10 = arith.constant 0 : index
      %c0_11 = arith.constant 0 : index
      %16 = vector.load %arg4[%c0_10, %c0_11] : memref<1x128xf32, #tpu.memory_space<vmem>>, vector<1x128xf32>
      %17 = vector.broadcast %16 : vector<1x128xf32> to vector<128x128xf32>
      %18 = arith.addf %15, %17 : vector<128x128xf32>
      %cst_12 = arith.constant 0.000000e+00 : f32
      %19 = vector.broadcast %cst_12 : f32 to vector<128x128xf32>
      %20 = arith.maximumf %18, %19 : vector<128x128xf32>
      %21 = arith.truncf %20 : vector<128x128xf32> to vector<128x128xbf16>
      %c0_13 = arith.constant 0 : index
      %c0_14 = arith.constant 0 : index
      %22 = vector.load %arg5[%c0_13, %c0_14] : memref<128x128xbf16, #tpu.memory_space<vmem>>, vector<128x128xbf16>
      tpu.vector_store %arg5[%c0_13, %c0_14], %21 {strides = array<i32>} : memref<128x128xbf16, #tpu.memory_space<vmem>>, vector<128x128xbf16>,
    } else {
    }
    return
  }
  func.func @transform_0(%arg0: i32, %arg1: i32) -> (i32, i32) {
    %c0_i32 = arith.constant 0 : i32
    return %arg0, %arg1 : i32, i32
  }
  func.func @transform_1(%arg0: i32, %arg1: i32) -> (i32, i32) {
    %c0_i32 = arith.constant 0 : i32
    %c0_i32_0 = arith.constant 0 : i32
    %c0_i32_1 = arith.constant 0 : i32
    return %c0_i32, %c0_i32_0 : i32, i32
  }
  func.func @transform_2(%arg0: i32, %arg1: i32) -> (i32, i32) {
    %c0_i32 = arith.constant 0 : i32
    %c0_i32_0 = arith.constant 0 : i32
    %c0_i32_1 = arith.constant 0 : i32
    return %c0_i32, %c0_i32_0 : i32, i32
  }
  func.func @transform_3(%arg0: i32, %arg1: i32) -> (i32, i32) {
    %c0_i32 = arith.constant 0 : i32
    %c0_i32_0 = arith.constant 0 : i32
    return %arg0, %c0_i32 : i32, i32
  }
}

module attributes {stable_mosaic.version = 11 : i64} {
  func.func @_aggregate_kernel(%arg0: i32, %arg1: i32, %arg2: memref<128x128xbf16, #tpu.memory_space<vmem>>, %arg3: memref<256x128xbf16, #tpu.memory_space<vmem>>, %arg4: memref<1x128xf32, #tpu.memory_space<vmem>>, %arg5: memref<128x128xbf16, #tpu.memory_space<vmem>>, %arg6: memref<128x128xf32, #tpu.memory_space<vmem>>) attributes {dimension_semantics = [#tpu.dimension_semantics<parallel>, #tpu.dimension_semantics<arbitrary>], iteration_bounds = array<i64: 2, 2>, scalar_prefetch = 0 : i64, scratch_operands = 1 : i64, tpu.core_type = #tpu.core_type<tc>, window_params = [{transform_indices = @transform_0, window_bounds = array<i64: 128, 128>}, {pipeline_mode = #tpu.pipeline_mode<synchronous>, transform_indices = @transform_1, window_bounds = array<i64: 256, 128>}, {pipeline_mode = #tpu.pipeline_mode<synchronous>, transform_indices = @transform_2, window_bounds = array<i64: 1, 128>}, {transform_indices = @transform_3, window_bounds = array<i64: 128, 128>}]} {
    %c0_i32 = arith.constant 0 : i32
    %0 = arith.cmpi eq, %arg1, %c0_i32 : i32
    %1 = arith.extui %0 : i1 to i32
    %c0_i32_0 = arith.constant 0 : i32
    %2 = arith.cmpi ne, %1, %c0_i32_0 : i32
    scf.if %2 {
      %cst_8 = arith.constant 0.000000e+00 : f32
      %15 = vector.broadcast %cst_8 : f32 to vector<128x128xf32>
      %c0_9 = arith.constant 0 : index
      %c0_10 = arith.constant 0 : index
      %16 = vector.load %arg6[%c0_9, %c0_10] : memref<128x128xf32, #tpu.memory_space<vmem>>, vector<128x128xf32>
      tpu.vector_store %arg6[%c0_9, %c0_10], %15 {strides = array<i32>} : memref<128x128xf32, #tpu.memory_space<vmem>>, vector<128x128xf32>,
    } else {
    }
    %c128_i32 = arith.constant 128 : i32
    %3 = arith.muli %arg1, %c128_i32 : i32
    %4 = tpu.assume_multiple %3, 128 : i32
    %c0 = arith.constant 0 : index
    %c0_1 = arith.constant 0 : index
    %5 = vector.load %arg6[%c0, %c0_1] : memref<128x128xf32, #tpu.memory_space<vmem>>, vector<128x128xf32>
    %c0_2 = arith.constant 0 : index
    %c0_3 = arith.constant 0 : index
    %6 = vector.load %arg2[%c0_2, %c0_3] : memref<128x128xbf16, #tpu.memory_space<vmem>>, vector<128x128xbf16>
    %7 = arith.index_cast %4 : i32 to index
    %c0_4 = arith.constant 0 : index
    %8 = vector.load %arg3[%7, %c0_4] : memref<256x128xbf16, #tpu.memory_space<vmem>>, vector<128x128xbf16>
    %cst = arith.constant dense<0.000000e+00> : vector<128x128xf32>
    %9 = tpu.matmul %6, %8, %cst {dimension_numbers = #tpu.dot_dimension_numbers<[1], [0], [0], [1], [0, 0, 1, 1], [], []>} : vector<128x128xbf16>, vector<128x128xbf16>, vector<128x128xf32> -> vector<128x128xf32>
    %10 = arith.addf %5, %9 : vector<128x128xf32>
    %c0_5 = arith.constant 0 : index
    %c0_6 = arith.constant 0 : index
    %11 = vector.load %arg6[%c0_5, %c0_6] : memref<128x128xf32, #tpu.memory_space<vmem>>, vector<128x128xf32>
    tpu.vector_store %arg6[%c0_5, %c0_6], %10 {strides = array<i32>} : memref<128x128xf32, #tpu.memory_space<vmem>>, vector<128x128xf32>,
    %c1_i32 = arith.constant 1 : i32
    %12 = arith.cmpi eq, %arg1, %c1_i32 : i32
    %13 = arith.extui %12 : i1 to i32
    %c0_i32_7 = arith.constant 0 : i32
    %14 = arith.cmpi ne, %13, %c0_i32_7 : i32
    scf.if %14 {
      %c0_8 = arith.constant 0 : index
      %c0_9 = arith.constant 0 : index
      %15 = vector.load %arg6[%c0_8, %c0_9] : memref<128x128xf32, #tpu.memory_space<vmem>>, vector<128x128xf32>
      %c0_10 = arith.constant 0 : index
      %c0_11 = arith.constant 0 : index
      %16 = vector.load %arg4[%c0_10, %c0_11] : memref<1x128xf32, #tpu.memory_space<vmem>>, vector<1x128xf32>
      %17 = vector.broadcast %16 : vector<1x128xf32> to vector<128x128xf32>
      %18 = arith.addf %15, %17 : vector<128x128xf32>
      %19 = arith.truncf %18 : vector<128x128xf32> to vector<128x128xbf16>
      %c0_12 = arith.constant 0 : index
      %c0_13 = arith.constant 0 : index
      %20 = vector.load %arg5[%c0_12, %c0_13] : memref<128x128xbf16, #tpu.memory_space<vmem>>, vector<128x128xbf16>
      tpu.vector_store %arg5[%c0_12, %c0_13], %19 {strides = array<i32>} : memref<128x128xbf16, #tpu.memory_space<vmem>>, vector<128x128xbf16>,
    } else {
    }
    return
  }
  func.func @transform_0(%arg0: i32, %arg1: i32) -> (i32, i32) {
    %c0_i32 = arith.constant 0 : i32
    return %arg0, %arg1 : i32, i32
  }
  func.func @transform_1(%arg0: i32, %arg1: i32) -> (i32, i32) {
    %c0_i32 = arith.constant 0 : i32
    %c0_i32_0 = arith.constant 0 : i32
    %c0_i32_1 = arith.constant 0 : i32
    return %c0_i32, %c0_i32_0 : i32, i32
  }
  func.func @transform_2(%arg0: i32, %arg1: i32) -> (i32, i32) {
    %c0_i32 = arith.constant 0 : i32
    %c0_i32_0 = arith.constant 0 : i32
    %c0_i32_1 = arith.constant 0 : i32
    return %c0_i32, %c0_i32_0 : i32, i32
  }
  func.func @transform_3(%arg0: i32, %arg1: i32) -> (i32, i32) {
    %c0_i32 = arith.constant 0 : i32
    %c0_i32_0 = arith.constant 0 : i32
    return %arg0, %c0_i32 : i32, i32
  }
}

module attributes {stable_mosaic.version = 11 : i64} {
  func.func @_pool_head_kernel(%arg0: i32, %arg1: memref<8x128xbf16, #tpu.memory_space<vmem>>, %arg2: memref<128x128xbf16, #tpu.memory_space<vmem>>, %arg3: memref<128x128xbf16, #tpu.memory_space<vmem>>, %arg4: memref<1x128xf32, #tpu.memory_space<vmem>>, %arg5: memref<128x128xbf16, #tpu.memory_space<vmem>>, %arg6: memref<1x128xf32, #tpu.memory_space<vmem>>, %arg7: memref<8x128xf32, #tpu.memory_space<vmem>>, %arg8: memref<8x128xf32, #tpu.memory_space<vmem>>) attributes {dimension_semantics = [#tpu.dimension_semantics<arbitrary>], iteration_bounds = array<i64: 2>, scalar_prefetch = 0 : i64, scratch_operands = 1 : i64, tpu.core_type = #tpu.core_type<tc>, window_params = [{transform_indices = @transform_0, window_bounds = array<i64: 8, 128>}, {transform_indices = @transform_1, window_bounds = array<i64: 128, 128>}, {pipeline_mode = #tpu.pipeline_mode<synchronous>, transform_indices = @transform_2, window_bounds = array<i64: 128, 128>}, {pipeline_mode = #tpu.pipeline_mode<synchronous>, transform_indices = @transform_3, window_bounds = array<i64: 1, 128>}, {pipeline_mode = #tpu.pipeline_mode<synchronous>, transform_indices = @transform_4, window_bounds = array<i64: 128, 128>}, {pipeline_mode = #tpu.pipeline_mode<synchronous>, transform_indices = @transform_5, window_bounds = array<i64: 1, 128>}, {pipeline_mode = #tpu.pipeline_mode<synchronous>, transform_indices = @transform_6, window_bounds = array<i64: 8, 128>}]} {
    %c0_i32 = arith.constant 0 : i32
    %0 = arith.cmpi eq, %arg0, %c0_i32 : i32
    %1 = arith.extui %0 : i1 to i32
    %c0_i32_0 = arith.constant 0 : i32
    %2 = arith.cmpi ne, %1, %c0_i32_0 : i32
    scf.if %2 {
      %cst_9 = arith.constant 0.000000e+00 : f32
      %12 = vector.broadcast %cst_9 : f32 to vector<8x128xf32>
      %c0_10 = arith.constant 0 : index
      %c0_11 = arith.constant 0 : index
      %13 = vector.load %arg8[%c0_10, %c0_11] : memref<8x128xf32, #tpu.memory_space<vmem>>, vector<8x128xf32>
      tpu.vector_store %arg8[%c0_10, %c0_11], %12 {strides = array<i32>} : memref<8x128xf32, #tpu.memory_space<vmem>>, vector<8x128xf32>,
    } else {
    }
    %c0 = arith.constant 0 : index
    %c0_1 = arith.constant 0 : index
    %3 = vector.load %arg8[%c0, %c0_1] : memref<8x128xf32, #tpu.memory_space<vmem>>, vector<8x128xf32>
    %c0_2 = arith.constant 0 : index
    %c0_3 = arith.constant 0 : index
    %4 = vector.load %arg1[%c0_2, %c0_3] : memref<8x128xbf16, #tpu.memory_space<vmem>>, vector<8x128xbf16>
    %c0_4 = arith.constant 0 : index
    %c0_5 = arith.constant 0 : index
    %5 = vector.load %arg2[%c0_4, %c0_5] : memref<128x128xbf16, #tpu.memory_space<vmem>>, vector<128x128xbf16>
    %cst = arith.constant dense<0.000000e+00> : vector<8x128xf32>
    %6 = tpu.matmul %4, %5, %cst {dimension_numbers = #tpu.dot_dimension_numbers<[1], [0], [0], [1], [0, 0, 1, 1], [], []>} : vector<8x128xbf16>, vector<128x128xbf16>, vector<8x128xf32> -> vector<8x128xf32>
    %7 = arith.addf %3, %6 : vector<8x128xf32>
    %c0_6 = arith.constant 0 : index
    %c0_7 = arith.constant 0 : index
    %8 = vector.load %arg8[%c0_6, %c0_7] : memref<8x128xf32, #tpu.memory_space<vmem>>, vector<8x128xf32>
    tpu.vector_store %arg8[%c0_6, %c0_7], %7 {strides = array<i32>} : memref<8x128xf32, #tpu.memory_space<vmem>>, vector<8x128xf32>,
    %c1_i32 = arith.constant 1 : i32
    %9 = arith.cmpi eq, %arg0, %c1_i32 : i32
    %10 = arith.extui %9 : i1 to i32
    %c0_i32_8 = arith.constant 0 : i32
    %11 = arith.cmpi ne, %10, %c0_i32_8 : i32
    scf.if %11 {
      %c0_9 = arith.constant 0 : index
      %c0_10 = arith.constant 0 : index
      %12 = vector.load %arg8[%c0_9, %c0_10] : memref<8x128xf32, #tpu.memory_space<vmem>>, vector<8x128xf32>
      %13 = arith.truncf %12 : vector<8x128xf32> to vector<8x128xbf16>
      %c0_11 = arith.constant 0 : index
      %c0_12 = arith.constant 0 : index
      %14 = vector.load %arg3[%c0_11, %c0_12] : memref<128x128xbf16, #tpu.memory_space<vmem>>, vector<128x128xbf16>
      %cst_13 = arith.constant dense<0.000000e+00> : vector<8x128xf32>
      %15 = tpu.matmul %13, %14, %cst_13 {dimension_numbers = #tpu.dot_dimension_numbers<[1], [0], [0], [1], [0, 0, 1, 1], [], []>} : vector<8x128xbf16>, vector<128x128xbf16>, vector<8x128xf32> -> vector<8x128xf32>
      %c0_14 = arith.constant 0 : index
      %c0_15 = arith.constant 0 : index
      %16 = vector.load %arg4[%c0_14, %c0_15] : memref<1x128xf32, #tpu.memory_space<vmem>>, vector<1x128xf32>
      %17 = vector.broadcast %16 : vector<1x128xf32> to vector<8x128xf32>
      %18 = arith.addf %15, %17 : vector<8x128xf32>
      %cst_16 = arith.constant 0.000000e+00 : f32
      %19 = vector.broadcast %cst_16 : f32 to vector<8x128xf32>
      %20 = arith.maximumf %18, %19 : vector<8x128xf32>
      %21 = arith.truncf %20 : vector<8x128xf32> to vector<8x128xbf16>
      %c0_17 = arith.constant 0 : index
      %c0_18 = arith.constant 0 : index
      %22 = vector.load %arg5[%c0_17, %c0_18] : memref<128x128xbf16, #tpu.memory_space<vmem>>, vector<128x128xbf16>
      %cst_19 = arith.constant dense<0.000000e+00> : vector<8x128xf32>
      %23 = tpu.matmul %21, %22, %cst_19 {dimension_numbers = #tpu.dot_dimension_numbers<[1], [0], [0], [1], [0, 0, 1, 1], [], []>} : vector<8x128xbf16>, vector<128x128xbf16>, vector<8x128xf32> -> vector<8x128xf32>
      %c0_20 = arith.constant 0 : index
      %c0_21 = arith.constant 0 : index
      %24 = vector.load %arg6[%c0_20, %c0_21] : memref<1x128xf32, #tpu.memory_space<vmem>>, vector<1x128xf32>
      %25 = vector.broadcast %24 : vector<1x128xf32> to vector<8x128xf32>
      %26 = arith.addf %23, %25 : vector<8x128xf32>
      %c0_22 = arith.constant 0 : index
      %c0_23 = arith.constant 0 : index
      %27 = vector.load %arg7[%c0_22, %c0_23] : memref<8x128xf32, #tpu.memory_space<vmem>>, vector<8x128xf32>
      tpu.vector_store %arg7[%c0_22, %c0_23], %26 {strides = array<i32>} : memref<8x128xf32, #tpu.memory_space<vmem>>, vector<8x128xf32>,
    } else {
    }
    return
  }
  func.func @transform_0(%arg0: i32) -> (i32, i32) {
    %c0_i32 = arith.constant 0 : i32
    %c0_i32_0 = arith.constant 0 : i32
    return %c0_i32, %arg0 : i32, i32
  }
  func.func @transform_1(%arg0: i32) -> (i32, i32) {
    %c0_i32 = arith.constant 0 : i32
    %c0_i32_0 = arith.constant 0 : i32
    return %arg0, %c0_i32 : i32, i32
  }
  func.func @transform_2(%arg0: i32) -> (i32, i32) {
    %c0_i32 = arith.constant 0 : i32
    %c0_i32_0 = arith.constant 0 : i32
    %c0_i32_1 = arith.constant 0 : i32
    return %c0_i32, %c0_i32_0 : i32, i32
  }
  func.func @transform_3(%arg0: i32) -> (i32, i32) {
    %c0_i32 = arith.constant 0 : i32
    %c0_i32_0 = arith.constant 0 : i32
    %c0_i32_1 = arith.constant 0 : i32
    return %c0_i32, %c0_i32_0 : i32, i32
  }
  func.func @transform_4(%arg0: i32) -> (i32, i32) {
    %c0_i32 = arith.constant 0 : i32
    %c0_i32_0 = arith.constant 0 : i32
    %c0_i32_1 = arith.constant 0 : i32
    return %c0_i32, %c0_i32_0 : i32, i32
  }
  func.func @transform_5(%arg0: i32) -> (i32, i32) {
    %c0_i32 = arith.constant 0 : i32
    %c0_i32_0 = arith.constant 0 : i32
    %c0_i32_1 = arith.constant 0 : i32
    return %c0_i32, %c0_i32_0 : i32, i32
  }
  func.func @transform_6(%arg0: i32) -> (i32, i32) {
    %c0_i32 = arith.constant 0 : i32
    %c0_i32_0 = arith.constant 0 : i32
    %c0_i32_1 = arith.constant 0 : i32
    return %c0_i32, %c0_i32_0 : i32, i32
  }
}

</mosaic_0001>

<llo_original>
// kernel: seal_gcn_forward.5
$region0: #{seal_gcn_forward.5}
  #allocation0 [shape = 'u32[]', space=smem, size = 0x4, offset = 0x4, fixed_abs, tag = 'smem constant byte address 0x4 - core index']
  #allocation1 [shape = 'u32[144,128]{1,0:T(1,128)}', space=vmem, size = 0x12000, scoped, tag = 'internal scratch']
  %s0 = inlined_call_operand.vmem [shape: bf16[256,128], index: 0, kind: input, shape index: {}]
  %s1 = inlined_call_operand.vmem [shape: bf16[128,128], index: 1, kind: input, shape index: {}]
  %s2 = inlined_call_operand.vmem [shape: bf16[256,128], index: 2, kind: output, shape index: {}]
  %s3 = sld [smem:[#allocation0]]
  $region41: #{seal_gcn_forward.5} parent=0
    _
  %s5 = ssub.s32 1, %s3
  %s6 = scalar_select 0, %s5, %s3
  loop: start=0, step=1, limit=4
  $region2: #{seal_gcn_forward.5} parent=0 // loop_pre_header
    _
  $region3: #{seal_gcn_forward.5} parent=0 // loop_header
    %s8 = sphi 0, %s12
    %p9 = scmp.ge.s32.totalorder %s8, 4
    %s18 = sphi 0, %s20
    %s21 = sphi 0, %s18
    %s22 = sphi 0, %s21
    %s38 = sphi 0, %s22
    %s42 = sphi 0, %s42
    %s44 = sphi 0, %s42
    %s45 = sphi 0, %s44
    %s59 = sphi 0, %s45
    %s65 = sphi 0, %s67
    %s68 = sphi 0, %s65
    %s69 = sphi 0, %s68
    %s85 = sphi 0, %s69
  $region4: #{seal_gcn_forward.5} parent=0 // loop_header_branch
    %11 = sbr.rel (%p9) target = $region8
  $region5: #{seal_gcn_forward.5} parent=0 // loop_body
    %s13 = ssub.s32 %s8, 1
    %s14 = ssub.s32 %s8, 2
    %s15 = sadd.s32 %s8, 1
    %s16 = ssub.s32 %s8, %s15
    %p17 = scmp.eq.s32.totalorder %s16, 0
    %s19 = sadd.s32 %s18, 1
    %s20 = scalar_select %p17, %s18, %s19
    %p23 = pneg %p17
    %p24 = scmp.eq.s32.totalorder %s8, 1
    %p25 = por %p23, %p24
    %p26 = scmp.ne.s32.totalorder %s18, %s21
    %p27 = scmp.eq.s32.totalorder %s8, 0
    %p28 = por %p26, %p27
    %p29 = scmp.ne.s32.totalorder %s18, %s21
    %p30 = scmp.eq.s32.totalorder %s13, 1
    %p31 = por %p29, %p30
    %p32 = scmp.ne.s32.totalorder %s21, %s22
    %p33 = scmp.eq.s32.totalorder %s13, 0
    %p34 = por %p32, %p33
    %p35 = scmp.ne.s32.totalorder %s21, %s22
    %p36 = scmp.eq.s32.totalorder %s14, 1
    %p37 = por %p35, %p36
    %p39 = scmp.ne.s32.totalorder %s22, %s38
    %p40 = scmp.eq.s32.totalorder %s14, 0
    %p41 = por %p39, %p40
    %s43 = sadd.s32 %s42, 1
    %p46 = scmp.eq.s32.totalorder %s8, 1
    %p47 = scmp.ne.s32.totalorder %s42, %s44
    %p48 = scmp.eq.s32.totalorder %s8, 0
    %p49 = por %p47, %p48
    %p50 = scmp.ne.s32.totalorder %s42, %s44
    %p51 = scmp.eq.s32.totalorder %s13, 1
    %p52 = por %p50, %p51
    %p53 = scmp.ne.s32.totalorder %s44, %s45
    %p54 = scmp.eq.s32.totalorder %s13, 0
    %p55 = por %p53, %p54
    %p56 = scmp.ne.s32.totalorder %s44, %s45
    %p57 = scmp.eq.s32.totalorder %s14, 1
    %p58 = por %p56, %p57
    %p60 = scmp.ne.s32.totalorder %s45, %s59
    %p61 = scmp.eq.s32.totalorder %s14, 0
    %p62 = por %p60, %p61
    %s63 = ssub.s32 %s8, %s15
    %p64 = scmp.eq.s32.totalorder %s63, 0
    %s66 = sadd.s32 %s65, 1
    %s67 = scalar_select %p64, %s65, %s66
    %p70 = pneg %p64
    %p71 = scmp.eq.s32.totalorder %s8, 1
    %p72 = por %p70, %p71
    %p73 = scmp.ne.s32.totalorder %s65, %s68
    %p74 = scmp.eq.s32.totalorder %s8, 0
    %p75 = por %p73, %p74
    %p76 = scmp.ne.s32.totalorder %s65, %s68
    %p77 = scmp.eq.s32.totalorder %s13, 1
    %p78 = por %p76, %p77
    %p79 = scmp.ne.s32.totalorder %s68, %s69
    %p80 = scmp.eq.s32.totalorder %s13, 0
    %p81 = por %p79, %p80
    %p82 = scmp.ne.s32.totalorder %s68, %s69
    %p83 = scmp.eq.s32.totalorder %s14, 1
    %p84 = por %p82, %p83
    %p86 = scmp.ne.s32.totalorder %s69, %s85
    %p87 = scmp.eq.s32.totalorder %s14, 0
    %p88 = por %p86, %p87
    %p89 = scmp.le.s32.totalorder 1, %s8
    %p90 = scmp.lt.s32.totalorder %s8, 3
    %p91 = pnand %p89, %p90
    %p92 = pneg %p91
    // Predicated region
    $region9: #{seal_gcn_forward.5} parent=5 // pred_check
      _
    $region10: #{seal_gcn_forward.5} parent=5 // pred_check_branch
      %94 = sbr.rel (%p91) target = $region12
    $region11: #{seal_gcn_forward.5} parent=5 // pred_region
      %s95 = ssub.s32 %s8, 1
      // Predicated region
      $region13: #{seal_gcn_forward.5} parent=11 // pred_check
        %p96 = pneg %p55
      $region14: #{seal_gcn_forward.5} parent=11 // pred_check_branch
        %98 = sbr.rel (%p96) target = $region16
      $region15: #{seal_gcn_forward.5} parent=11 // pred_region
        _
      $region16: #{seal_gcn_forward.5} parent=11 // pred_fallthru
        _
    $region12: #{seal_gcn_forward.5} parent=5 // pred_fallthru
      _
    %p99 = scmp.lt.s32.totalorder %s8, 2
    // Predicated region
    $region17: #{seal_gcn_forward.5} parent=5 // pred_check
      %p100 = pneg %p99
    $region18: #{seal_gcn_forward.5} parent=5 // pred_check_branch
      %102 = sbr.rel (%p100) target = $region20
    $region19: #{seal_gcn_forward.5} parent=5 // pred_region
      // Predicated region
      $region21: #{seal_gcn_forward.5} parent=19 // pred_check
        %p103 = pneg %p28
      $region22: #{seal_gcn_forward.5} parent=19 // pred_check_branch
        %105 = sbr.rel (%p103) target = $region24
      $region23: #{seal_gcn_forward.5} parent=19 // pred_region
        %s106 = smul.u32 16, %s8
        %p107 = scmp.lt.s32.totalorder %s106, 31
        %s108 = scalar_select %p107, %s106, 31
        %s109 = smul.addr %s108, 4
        %s110 = scalar_lea.vmem %s0, %s109
        %s111 = smul.u32 16, %s8
      $region24: #{seal_gcn_forward.5} parent=19 // pred_fallthru
        _
    $region20: #{seal_gcn_forward.5} parent=5 // pred_fallthru
      _
    %p112 = scmp.le.s32.totalorder 1, %s8
    %p113 = scmp.lt.s32.totalorder %s8, 3
    %p114 = pnand %p112, %p113
    %p115 = pneg %p114
    // Predicated region
    $region25: #{seal_gcn_forward.5} parent=5 // pred_check
      _
    $region26: #{seal_gcn_forward.5} parent=5 // pred_check_branch
      %117 = sbr.rel (%p114) target = $region28
    $region27: #{seal_gcn_forward.5} parent=5 // pred_region
      %s118 = ssub.s32 %s8, 1
      %s119 = smul.u32 16, %s13
      %p120 = scmp.lt.s32.totalorder %s119, 31
      %s121 = scalar_select %p120, %s119, 31
      %s122 = smul.addr %s121, 4
      %s123 = scalar_lea.vmem %s0, %s122
      %p124 = pneg %p34
      %p125 = pneg %p31
      %p126 = pneg %p55
      %p127 = pneg %p52
      %p128 = pneg %p81
      %p129 = pneg %p78
      %s130 = smul.u32 16, %s13
      %p131 = scmp.lt.s32.totalorder %s130, 31
      %s132 = scalar_select %p131, %s130, 31
      %s133 = smul.addr %s132, 4
      %s134 = scalar_lea.vmem %s2, %s133
      %s135 = smul.u32 16, %s13
      %p136 = scmp.lt.s32.totalorder %s135, 31
      %s137 = scalar_select %p136, %s135, 31
      %s138 = smul.addr %s137, 4
      %s139 = scalar_lea.vmem %s0, %s138
      %s140 = smul.u32 16, %s13
      %s141 = smul.u32 16, %s13
      %p142 = scmp.lt.s32.totalorder %s141, 31
      %s143 = scalar_select %p142, %s141, 31
      %s144 = smul.addr %s143, 4
      %s145 = scalar_lea.vmem %s2, %s144
      %s146 = smul.u32 16, %s13
      %v148 = vld [vmem:[%s139] sm:$0xf]
      %v149 = vld [vmem:[%s139 + $0x4] sm:$0xf]
      %v150 = vld [vmem:[%s139 + $0x8] sm:$0xf]
      %v151 = vld [vmem:[%s139 + $0xc] sm:$0xf]
      %v152 = vld [vmem:[%s139 + $0x10] sm:$0xf]
      %v153 = vld [vmem:[%s139 + $0x14] sm:$0xf]
      %v154 = vld [vmem:[%s139 + $0x18] sm:$0xf]
      %v155 = vld [vmem:[%s139 + $0x1c] sm:$0xf]
      %v156 = vld [vmem:[%s139 + $0x20] sm:$0xf]
      %v157 = vld [vmem:[%s139 + $0x24] sm:$0xf]
      %v158 = vld [vmem:[%s139 + $0x28] sm:$0xf]
      %v159 = vld [vmem:[%s139 + $0x2c] sm:$0xf]
      %v160 = vld [vmem:[%s139 + $0x30] sm:$0xf]
      %v161 = vld [vmem:[%s139 + $0x34] sm:$0xf]
      %v162 = vld [vmem:[%s139 + $0x38] sm:$0xf]
      %v163 = vld [vmem:[%s139 + $0x3c] sm:$0xf]
      %v164 = vld [vmem:[%s1] sm:$0xf]
      %v165 = vld [vmem:[%s1 + $0x4] sm:$0xf]
      %v166 = vld [vmem:[%s1 + $0x8] sm:$0xf]
      %v167 = vld [vmem:[%s1 + $0xc] sm:$0xf]
      %v168 = vld [vmem:[%s1 + $0x10] sm:$0xf]
      %v169 = vld [vmem:[%s1 + $0x14] sm:$0xf]
      %v170 = vld [vmem:[%s1 + $0x18] sm:$0xf]
      %v171 = vld [vmem:[%s1 + $0x1c] sm:$0xf]
      %v172 = vld [vmem:[%s1 + $0x20] sm:$0xf]
      %v173 = vld [vmem:[%s1 + $0x24] sm:$0xf]
      %v174 = vld [vmem:[%s1 + $0x28] sm:$0xf]
      %v175 = vld [vmem:[%s1 + $0x2c] sm:$0xf]
      %v176 = vld [vmem:[%s1 + $0x30] sm:$0xf]
      %v177 = vld [vmem:[%s1 + $0x34] sm:$0xf]
      %v178 = vld [vmem:[%s1 + $0x38] sm:$0xf]
      %v179 = vld [vmem:[%s1 + $0x3c] sm:$0xf]
      %v196 = vunpack.c.l.b16 %v148
      %v197 = vunpack.c.l.b16 %v149
      %v198 = vunpack.c.l.b16 %v150
      %v199 = vunpack.c.l.b16 %v151
      %v200 = vunpack.c.l.b16 %v152
      %v201 = vunpack.c.l.b16 %v153
      %v202 = vunpack.c.l.b16 %v154
      %v203 = vunpack.c.l.b16 %v155
      %v204 = vunpack.c.l.b16 %v156
      %v205 = vunpack.c.l.b16 %v157
      %v206 = vunpack.c.l.b16 %v158
      %v207 = vunpack.c.l.b16 %v159
      %v208 = vunpack.c.l.b16 %v160
      %v209 = vunpack.c.l.b16 %v161
      %v210 = vunpack.c.l.b16 %v162
      %v211 = vunpack.c.l.b16 %v163
      %v212 = vpack.c.b16 %v197, %v196
      %v213 = vpack.c.b16 %v199, %v198
      %v214 = vpack.c.b16 %v201, %v200
      %v215 = vpack.c.b16 %v203, %v202
      %v216 = vpack.c.b16 %v205, %v204
      %v217 = vpack.c.b16 %v207, %v206
      %v218 = vpack.c.b16 %v209, %v208
      %v219 = vpack.c.b16 %v211, %v210
      %v244 = vunpack.c.l.b16 %v164
      %v245 = vunpack.c.l.b16 %v165
      %v246 = vunpack.c.l.b16 %v166
      %v247 = vunpack.c.l.b16 %v167
      %v248 = vunpack.c.l.b16 %v168
      %v249 = vunpack.c.l.b16 %v169
      %v250 = vunpack.c.l.b16 %v170
      %v251 = vunpack.c.l.b16 %v171
      %v252 = vunpack.c.l.b16 %v172
      %v253 = vunpack.c.l.b16 %v173
      %v254 = vunpack.c.l.b16 %v174
      %v255 = vunpack.c.l.b16 %v175
      %v256 = vunpack.c.l.b16 %v176
      %v257 = vunpack.c.l.b16 %v177
      %v258 = vunpack.c.l.b16 %v178
      %v259 = vunpack.c.l.b16 %v179
      %v260 = vpack.c.b16 %v245, %v244
      %v261 = vpack.c.b16 %v247, %v246
      %v262 = vpack.c.b16 %v249, %v248
      %v263 = vpack.c.b16 %v251, %v250
      %v264 = vpack.c.b16 %v253, %v252
      %v265 = vpack.c.b16 %v255, %v254
      %v266 = vpack.c.b16 %v257, %v256
      %v267 = vpack.c.b16 %v259, %v258
      %276 = vmatprep.subr.bf16.mxu0 0
      %277 = vmatpush1.bf16.msra.mxu0 %v260
      %278 = vmatprep.subr.bf16.mxu0 0
      %279 = vmatpush1.bf16.msra.mxu0 %v261
      %280 = vmatprep.subr.bf16.mxu0 0
      %281 = vmatpush1.bf16.msra.mxu0 %v262
      %282 = vmatprep.subr.bf16.mxu0 0
      %283 = vmatpush1.bf16.msra.mxu0 %v263
      %284 = vmatprep.subr.bf16.mxu0 0
      %285 = vmatpush1.bf16.msra.mxu0 %v264
      %286 = vmatprep.subr.bf16.mxu0 0
      %287 = vmatpush1.bf16.msra.mxu0 %v265
      %288 = vmatprep.subr.bf16.mxu0 0
      %289 = vmatpush1.bf16.msra.mxu0 %v266
      %290 = vmatprep.subr.bf16.mxu0 0
      %291 = vmatpush1.bf16.msra.mxu0 %v267
      %292 = vmatprep.subr.bf16.mxu0 0
      %293 = vmatpush1.bf16.msra.mxu0 0
      %294 = vmatprep.subr.bf16.mxu0 0
      %295 = vmatpush1.bf16.msra.mxu0 0
      %296 = vmatprep.subr.bf16.mxu0 0
      %297 = vmatpush1.bf16.msra.mxu0 0
      %298 = vmatprep.subr.bf16.mxu0 0
      %299 = vmatpush1.bf16.msra.mxu0 0
      %300 = vmatprep.subr.bf16.mxu0 0
      %301 = vmatpush1.bf16.msra.mxu0 0
      %302 = vmatprep.subr.bf16.mxu0 0
      %303 = vmatpush1.bf16.msra.mxu0 0
      %304 = vmatprep.subr.bf16.mxu0 0
      %305 = vmatpush1.bf16.msra.mxu0 0
      %306 = vmatprep.subr.bf16.mxu0 0
      %307 = vmatpush1.bf16.msra.mxu0 0
      %308 = vmatprep.mubr.bf16.mxu0 0
      %309 = vmatmul.mubr.bf16.gmra.mrb[0].mxu0 %v212
      %v310 = vpop.f32.mrb[0].mxu0
      %v311 = vadd.f32 0.0, %v310
      %v312 = vpop.f32.mrb[0].mxu0
      %v313 = vpop.f32.mrb[0].mxu0
      %v314 = vadd.f32 0.0, %v313
      %v315 = vpop.f32.mrb[0].mxu0
      %316 = vmatprep.mubr.bf16.mxu0 0
      %317 = vmatmul.mubr.bf16.gmra.mrb[0].mxu0 %v213
      %v318 = vpop.f32.mrb[0].mxu0
      %v319 = vadd.f32 0.0, %v318
      %v320 = vpop.f32.mrb[0].mxu0
      %v321 = vpop.f32.mrb[0].mxu0
      %v322 = vadd.f32 0.0, %v321
      %v323 = vpop.f32.mrb[0].mxu0
      %324 = vmatprep.mubr.bf16.mxu0 0
      %325 = vmatmul.mubr.bf16.gmra.mrb[0].mxu0 %v214
      %v326 = vpop.f32.mrb[0].mxu0
      %v327 = vadd.f32 0.0, %v326
      %v328 = vpop.f32.mrb[0].mxu0
      %v329 = vpop.f32.mrb[0].mxu0
      %v330 = vadd.f32 0.0, %v329
      %v331 = vpop.f32.mrb[0].mxu0
      %332 = vmatprep.mubr.bf16.mxu0 0
      %333 = vmatmul.mubr.bf16.gmra.mrb[0].mxu0 %v215
      %v334 = vpop.f32.mrb[0].mxu0
      %v335 = vadd.f32 0.0, %v334
      %v336 = vpop.f32.mrb[0].mxu0
      %v337 = vpop.f32.mrb[0].mxu0
      %v338 = vadd.f32 0.0, %v337
      %v339 = vpop.f32.mrb[0].mxu0
      %340 = vmatprep.mubr.bf16.mxu0 0
      %341 = vmatmul.mubr.bf16.gmra.mrb[0].mxu0 %v216
      %v342 = vpop.f32.mrb[0].mxu0
      %v343 = vadd.f32 0.0, %v342
      %v344 = vpop.f32.mrb[0].mxu0
      %v345 = vpop.f32.mrb[0].mxu0
      %v346 = vadd.f32 0.0, %v345
      %v347 = vpop.f32.mrb[0].mxu0
      %348 = vmatprep.mubr.bf16.mxu0 0
      %349 = vmatmul.mubr.bf16.gmra.mrb[0].mxu0 %v217
      %v350 = vpop.f32.mrb[0].mxu0
      %v351 = vadd.f32 0.0, %v350
      %v352 = vpop.f32.mrb[0].mxu0
      %v353 = vpop.f32.mrb[0].mxu0
      %v354 = vadd.f32 0.0, %v353
      %v355 = vpop.f32.mrb[0].mxu0
      %356 = vmatprep.mubr.bf16.mxu0 0
      %357 = vmatmul.mubr.bf16.gmra.mrb[0].mxu0 %v218
      %v358 = vpop.f32.mrb[0].mxu0
      %v359 = vadd.f32 0.0, %v358
      %v360 = vpop.f32.mrb[0].mxu0
      %v361 = vpop.f32.mrb[0].mxu0
      %v362 = vadd.f32 0.0, %v361
      %v363 = vpop.f32.mrb[0].mxu0
      %364 = vmatprep.mubr.bf16.mxu0 0
      %365 = vmatmul.mubr.bf16.gmra.mrb[0].mxu0 %v219
      %v366 = vpop.f32.mrb[0].mxu0
      %v367 = vadd.f32 0.0, %v366
      %v368 = vpop.f32.mrb[0].mxu0
      %v369 = vpop.f32.mrb[0].mxu0
      %v370 = vadd.f32 0.0, %v369
      %v371 = vpop.f32.mrb[0].mxu0
      %372 = vdwg.mxu0
      %v373 = vpack.c.bf16 %v314, %v311
      %v374 = vpack.c.bf16 %v322, %v319
      %v375 = vpack.c.bf16 %v330, %v327
      %v376 = vpack.c.bf16 %v338, %v335
      %v377 = vpack.c.bf16 %v346, %v343
      %v378 = vpack.c.bf16 %v354, %v351
      %v379 = vpack.c.bf16 %v362, %v359
      %v380 = vpack.c.bf16 %v370, %v367
      %v389 = vunpack.c.l.b16 %v373
      %v390 = vunpack.c.h.b16 %v373
      %v391 = vunpack.c.l.b16 %v374
      %v392 = vunpack.c.h.b16 %v374
      %v393 = vunpack.c.l.b16 %v375
      %v394 = vunpack.c.h.b16 %v375
      %v395 = vunpack.c.l.b16 %v376
      %v396 = vunpack.c.h.b16 %v376
      %v397 = vunpack.c.l.b16 %v377
      %v398 = vunpack.c.h.b16 %v377
      %v399 = vunpack.c.l.b16 %v378
      %v400 = vunpack.c.h.b16 %v378
      %v401 = vunpack.c.l.b16 %v379
      %v402 = vunpack.c.h.b16 %v379
      %v403 = vunpack.c.l.b16 %v380
      %v404 = vunpack.c.h.b16 %v380
      %v405 = vpack.c.b16 %v389, %v389
      %v406 = vpack.c.b16 %v390, %v390
      %v407 = vpack.c.b16 %v391, %v391
      %v408 = vpack.c.b16 %v392, %v392
      %v409 = vpack.c.b16 %v393, %v393
      %v410 = vpack.c.b16 %v394, %v394
      %v411 = vpack.c.b16 %v395, %v395
      %v412 = vpack.c.b16 %v396, %v396
      %v413 = vpack.c.b16 %v397, %v397
      %v414 = vpack.c.b16 %v398, %v398
      %v415 = vpack.c.b16 %v399, %v399
      %v416 = vpack.c.b16 %v400, %v400
      %v417 = vpack.c.b16 %v401, %v401
      %v418 = vpack.c.b16 %v402, %v402
      %v419 = vpack.c.b16 %v403, %v403
      %v420 = vpack.c.b16 %v404, %v404
      %437 = vst [vmem:[%s145] sm:$0xf] %v405
      %438 = vst [vmem:[%s145 + $0x4] sm:$0xf] %v406
      %439 = vst [vmem:[%s145 + $0x8] sm:$0xf] %v407
      %440 = vst [vmem:[%s145 + $0xc] sm:$0xf] %v408
      %441 = vst [vmem:[%s145 + $0x10] sm:$0xf] %v409
      %442 = vst [vmem:[%s145 + $0x14] sm:$0xf] %v410
      %443 = vst [vmem:[%s145 + $0x18] sm:$0xf] %v411
      %444 = vst [vmem:[%s145 + $0x1c] sm:$0xf] %v412
      %445 = vst [vmem:[%s145 + $0x20] sm:$0xf] %v413
      %446 = vst [vmem:[%s145 + $0x24] sm:$0xf] %v414
      %447 = vst [vmem:[%s145 + $0x28] sm:$0xf] %v415
      %448 = vst [vmem:[%s145 + $0x2c] sm:$0xf] %v416
      %449 = vst [vmem:[%s145 + $0x30] sm:$0xf] %v417
      %450 = vst [vmem:[%s145 + $0x34] sm:$0xf] %v418
      %451 = vst [vmem:[%s145 + $0x38] sm:$0xf] %v419
      %452 = vst [vmem:[%s145 + $0x3c] sm:$0xf] %v420
      %s453 = smul.u32 16, %s13
      %p454 = scmp.lt.s32.totalorder %s453, 31
      %s455 = scalar_select %p454, %s453, 31
      %s456 = smul.addr %s455, 4
      %s457 = scalar_lea.vmem %s2, %s456
      // Predicated region
      $region29: #{seal_gcn_forward.5} parent=27 // pred_check
        %p458 = pneg %p78
      $region30: #{seal_gcn_forward.5} parent=27 // pred_check_branch
        %460 = sbr.rel (%p458) target = $region32
      $region31: #{seal_gcn_forward.5} parent=27 // pred_region
        %s461 = smul.u32 16, %s13
      $region32: #{seal_gcn_forward.5} parent=27 // pred_fallthru
        _
    $region28: #{seal_gcn_forward.5} parent=5 // pred_fallthru
      _
    %p462 = scmp.le.s32.totalorder 2, %s8
    // Predicated region
    $region33: #{seal_gcn_forward.5} parent=5 // pred_check
      %p463 = pneg %p462
    $region34: #{seal_gcn_forward.5} parent=5 // pred_check_branch
      %465 = sbr.rel (%p463) target = $region36
    $region35: #{seal_gcn_forward.5} parent=5 // pred_region
      %s466 = ssub.s32 %s8, 2
      // Predicated region
      $region37: #{seal_gcn_forward.5} parent=35 // pred_check
        %p467 = pneg %p84
      $region38: #{seal_gcn_forward.5} parent=35 // pred_check_branch
        %469 = sbr.rel (%p467) target = $region40
      $region39: #{seal_gcn_forward.5} parent=35 // pred_region
        %s470 = smul.u32 16, %s14
        %p471 = scmp.lt.s32.totalorder %s470, 31
        %s472 = scalar_select %p471, %s470, 31
        %s473 = smul.addr %s472, 4
        %s474 = scalar_lea.vmem %s2, %s473
      $region40: #{seal_gcn_forward.5} parent=35 // pred_fallthru
        _
    $region36: #{seal_gcn_forward.5} parent=5 // pred_fallthru
      _
  $region6: #{seal_gcn_forward.5} parent=0 // loop_footer
    %s12 = sadd.s32 1, %s8
  $region7: #{seal_gcn_forward.5} parent=0 // loop_footer_branch
    %7 = sbr.rel target = $region3
  $region8: #{seal_gcn_forward.5} parent=0 // loop_exit
    _

// kernel: seal_gcn_forward.6
$region0: #{seal_gcn_forward.6}
  #allocation0 [shape = 'u32[]', space=smem, size = 0x4, offset = 0x4, fixed_abs, tag = 'smem constant byte address 0x4 - core index']
  #allocation1 [shape = 'u32[144,128]{1,0:T(1,128)}', space=vmem, size = 0x12000, scoped, tag = 'internal scratch']
  #allocation2 [shape = 'f32[128,128]{1,0:T(8,128)}', space=vmem, size = 0x10000, scoped, tag = 'scratch operand']
  %s0 = inlined_call_operand.vmem [shape: bf16[256,256], index: 0, kind: input, shape index: {}]
  %s1 = inlined_call_operand.vmem [shape: bf16[256,128], index: 1, kind: input, shape index: {}]
  %s2 = inlined_call_operand.vmem [shape: f32[1,128], index: 2, kind: input, shape index: {}]
  %s3 = inlined_call_operand.vmem [shape: bf16[256,128], index: 3, kind: output, shape index: {}]
  %s4 = sld [smem:[#allocation0]]
  $region94: #{seal_gcn_forward.6} parent=0
    _
  %s6 = ssub.s32 1, %s4
  %s7 = scalar_select 0, %s6, %s4
  $region1: #{seal_gcn_forward.6} parent=0
    #allocation3 [shape = 'u8[65536]{0}', space=vmem, size = 0x10000, scoped, tag = 'input window, operand 0']
    loop: start=0, step=1, limit=6
    $region2: #{seal_gcn_forward.6} parent=1 // loop_pre_header
      _
    $region3: #{seal_gcn_forward.6} parent=1 // loop_header
      %s9 = sphi 0, %s13
      %p10 = scmp.ge.s32.totalorder %s9, 6
      %s16 = sphi 0, %s28
      %s17 = sphi 0, %s24
      %s18 = sphi 0, %s16
      %s19 = sphi 0, %s17
      %s20 = sphi 0, %s18
      %s21 = sphi 0, %s19
      %s33 = sphi 0, %s35
      %s36 = sphi 0, %s33
      %s37 = sphi 0, %s36
      %s53 = sphi 0, %s37
      %s57 = sphi 0, %s57
      %s59 = sphi 0, %s57
      %s60 = sphi 0, %s59
      %s74 = sphi 0, %s60
      %s78 = sphi 0, %s78
      %s80 = sphi 0, %s78
      %s81 = sphi 0, %s80
      %s95 = sphi 0, %s81
      %s101 = sphi 0, %s103
      %s104 = sphi 0, %s101
      %s105 = sphi 0, %s104
      %s121 = sphi 0, %s105
    $region4: #{seal_gcn_forward.6} parent=1 // loop_header_branch
      %12 = sbr.rel (%p10) target = $region8
    $region5: #{seal_gcn_forward.6} parent=1 // loop_body
      %s14 = ssub.s32 %s9, 1
      %s15 = ssub.s32 %s9, 2
      %s22 = sadd.s32 1, %s17
      %p23 = scmp.ge.s32.totalorder %s22, 2
      %s24 = scalar_select %p23, 0, %s22
      %s25 = sadd.s32 1, %s16
      %s26 = scalar_select %p23, %s25, %s16
      %p27 = scmp.ge.s32.totalorder %s26, 2
      %s28 = scalar_select %p27, 0, %s26
      %s29 = ssub.s32 %s16, %s28
      %s30 = ssub.s32 %s17, %s24
      %s31 = sor.u32 %s29, %s30
      %p32 = scmp.eq.s32.totalorder %s31, 0
      %s34 = sadd.s32 %s33, 1
      %s35 = scalar_select %p32, %s33, %s34
      %p38 = pneg %p32
      %p39 = scmp.eq.s32.totalorder %s9, 3
      %p40 = por %p38, %p39
      %p41 = scmp.ne.s32.totalorder %s33, %s36
      %p42 = scmp.eq.s32.totalorder %s9, 0
      %p43 = por %p41, %p42
      %p44 = scmp.ne.s32.totalorder %s33, %s36
      %p45 = scmp.eq.s32.totalorder %s14, 3
      %p46 = por %p44, %p45
      %p47 = scmp.ne.s32.totalorder %s36, %s37
      %p48 = scmp.eq.s32.totalorder %s14, 0
      %p49 = por %p47, %p48
      %p50 = scmp.ne.s32.totalorder %s36, %s37
      %p51 = scmp.eq.s32.totalorder %s15, 3
      %p52 = por %p50, %p51
      %p54 = scmp.ne.s32.totalorder %s37, %s53
      %p55 = scmp.eq.s32.totalorder %s15, 0
      %p56 = por %p54, %p55
      %s58 = sadd.s32 %s57, 1
      %p61 = scmp.eq.s32.totalorder %s9, 3
      %p62 = scmp.ne.s32.totalorder %s57, %s59
      %p63 = scmp.eq.s32.totalorder %s9, 0
      %p64 = por %p62, %p63
      %p65 = scmp.ne.s32.totalorder %s57, %s59
      %p66 = scmp.eq.s32.totalorder %s14, 3
      %p67 = por %p65, %p66
      %p68 = scmp.ne.s32.totalorder %s59, %s60
      %p69 = scmp.eq.s32.totalorder %s14, 0
      %p70 = por %p68, %p69
      %p71 = scmp.ne.s32.totalorder %s59, %s60
      %p72 = scmp.eq.s32.totalorder %s15, 3
      %p73 = por %p71, %p72
      %p75 = scmp.ne.s32.totalorder %s60, %s74
      %p76 = scmp.eq.s32.totalorder %s15, 0
      %p77 = por %p75, %p76
      %s79 = sadd.s32 %s78, 1
      %p82 = scmp.eq.s32.totalorder %s9, 3
      %p83 = scmp.ne.s32.totalorder %s78, %s80
      %p84 = scmp.eq.s32.totalorder %s9, 0
      %p85 = por %p83, %p84
      %p86 = scmp.ne.s32.totalorder %s78, %s80
      %p87 = scmp.eq.s32.totalorder %s14, 3
      %p88 = por %p86, %p87
      %p89 = scmp.ne.s32.totalorder %s80, %s81
      %p90 = scmp.eq.s32.totalorder %s14, 0
      %p91 = por %p89, %p90
      %p92 = scmp.ne.s32.totalorder %s80, %s81
      %p93 = scmp.eq.s32.totalorder %s15, 3
      %p94 = por %p92, %p93
      %p96 = scmp.ne.s32.totalorder %s81, %s95
      %p97 = scmp.eq.s32.totalorder %s15, 0
      %p98 = por %p96, %p97
      %s99 = ssub.s32 %s16, %s28
      %p100 = scmp.eq.s32.totalorder %s99, 0
      %s102 = sadd.s32 %s101, 1
      %s103 = scalar_select %p100, %s101, %s102
      %p106 = pneg %p100
      %p107 = scmp.eq.s32.totalorder %s9, 3
      %p108 = por %p106, %p107
      %p109 = scmp.ne.s32.totalorder %s101, %s104
      %p110 = scmp.eq.s32.totalorder %s9, 0
      %p111 = por %p109, %p110
      %p112 = scmp.ne.s32.totalorder %s101, %s104
      %p113 = scmp.eq.s32.totalorder %s14, 3
      %p114 = por %p112, %p113
      %p115 = scmp.ne.s32.totalorder %s104, %s105
      %p116 = scmp.eq.s32.totalorder %s14, 0
      %p117 = por %p115, %p116
      %p118 = scmp.ne.s32.totalorder %s104, %s105
      %p119 = scmp.eq.s32.totalorder %s15, 3
      %p120 = por %p118, %p119
      %p122 = scmp.ne.s32.totalorder %s105, %s121
      %p123 = scmp.eq.s32.totalorder %s15, 0
      %p124 = por %p122, %p123
      %p125 = scmp.le.s32.totalorder 1, %s9
      %p126 = scmp.lt.s32.totalorder %s9, 5
      %p127 = pnand %p125, %p126
      %p128 = pneg %p127
      // Predicated region
      $region9: #{seal_gcn_forward.6} parent=5 // pred_check
        _
      $region10: #{seal_gcn_forward.6} parent=5 // pred_check_branch
        %130 = sbr.rel (%p127) target = $region12
      $region11: #{seal_gcn_forward.6} parent=5 // pred_region
        %s131 = ssub.s32 %s9, 1
        // Predicated region
        $region13: #{seal_gcn_forward.6} parent=11 // pred_check
          %p132 = pneg %p70
        $region14: #{seal_gcn_forward.6} parent=11 // pred_check_branch
          %134 = sbr.rel (%p132) target = $region16
        $region15: #{seal_gcn_forward.6} parent=11 // pred_region
          _
        $region16: #{seal_gcn_forward.6} parent=11 // pred_fallthru
          _
        // Predicated region
        $region17: #{seal_gcn_forward.6} parent=11 // pred_check
          %p135 = pneg %p91
        $region18: #{seal_gcn_forward.6} parent=11 // pred_check_branch
          %137 = sbr.rel (%p135) target = $region20
        $region19: #{seal_gcn_forward.6} parent=11 // pred_region
          _
        $region20: #{seal_gcn_forward.6} parent=11 // pred_fallthru
          _
      $region12: #{seal_gcn_forward.6} parent=5 // pred_fallthru
        _
      %p138 = scmp.lt.s32.totalorder %s9, 4
      // Predicated region
      $region21: #{seal_gcn_forward.6} parent=5 // pred_check
        %p139 = pneg %p138
      $region22: #{seal_gcn_forward.6} parent=5 // pred_check_branch
        %141 = sbr.rel (%p139) target = $region24
      $region23: #{seal_gcn_forward.6} parent=5 // pred_region
        // Predicated region
        $region25: #{seal_gcn_forward.6} parent=23 // pred_check
          %p142 = pneg %p43
        $region26: #{seal_gcn_forward.6} parent=23 // pred_check_branch
          %144 = sbr.rel (%p142) target = $region28
        $region27: #{seal_gcn_forward.6} parent=23 // pred_region
          %s145 = sand.u32 %s33, 1
          %s146 = sand.u32 %s33, 1
          %s147 = smul.addr %s146, 64
          %s148 = scalar_lea.vmem [#allocation3], %s147
          %s149 = smul.u32 16, %s16
          %s150 = smul.addr %s149, 2
          %s151 = sadd.s32 %s17, %s150
          %s152 = smul.addr %s151, 4
          %s153 = scalar_lea.vmem %s0, %s152
          // Predicated region
          $region29: #{seal_gcn_forward.6} parent=27 // pred_check
            _
          $region30: #{seal_gcn_forward.6} parent=27 // pred_check_branch
            %155 = sbr.rel (0) target = $region32
          $region31: #{seal_gcn_forward.6} parent=27 // pred_region
            // Predicated region
            $region33: #{seal_gcn_forward.6} parent=31 // pred_check
              _
            $region34: #{seal_gcn_forward.6} parent=31 // pred_check_branch
              %157 = sbr.rel target = $region36
            $region35: #{seal_gcn_forward.6} parent=31 // pred_region
              // Predicated region
              $region48: #{seal_gcn_forward.6} parent=35 // pred_check
                _
              $region49: #{seal_gcn_forward.6} parent=35 // pred_check_branch
                %202 = sbr.rel (0) target = $region51
              $region50: #{seal_gcn_forward.6} parent=35 // pred_region
                loop: start=0, step=1, limit=1
                $region52: #{seal_gcn_forward.6} parent=50 // loop_pre_header
                  _
                $region53: #{seal_gcn_forward.6} parent=50 // loop_header
                  %s204 = sphi 0, %s208
                  %p205 = scmp.ge.s32.totalorder %s204, 1
                  %s209 = sphi %s153, %s153
                  %s210 = sphi %s148, %s148
                $region54: #{seal_gcn_forward.6} parent=50 // loop_header_branch
                  %207 = sbr.rel (%p205) target = $region58
                $region55: #{seal_gcn_forward.6} parent=50 // loop_body
                  _
                $region56: #{seal_gcn_forward.6} parent=50 // loop_footer
                  %s208 = sadd.s32 1, %s204
                $region57: #{seal_gcn_forward.6} parent=50 // loop_footer_branch
                  %203 = sbr.rel target = $region53
                $region58: #{seal_gcn_forward.6} parent=50 // loop_exit
                  _
                loop: start=0, step=1, limit=1
                $region59: #{seal_gcn_forward.6} parent=50 // loop_pre_header
                  _
                $region60: #{seal_gcn_forward.6} parent=50 // loop_header
                  %s213 = sphi 0, %s217
                  %p214 = scmp.ge.s32.totalorder %s213, 1
                  %s218 = sphi %s153, %s153
                  %s219 = sphi %s148, %s148
                $region61: #{seal_gcn_forward.6} parent=50 // loop_header_branch
                  %216 = sbr.rel (%p214) target = $region65
                $region62: #{seal_gcn_forward.6} parent=50 // loop_body
                  %v220 = vld [vmem:[%s218] sm:$0xf]
                  %221 = vst [vmem:[%s219] sm:$0xf] %v220
                  %v222 = vld [vmem:[%s218 + $0x8] sm:$0xf]
                  %223 = vst [vmem:[%s219 + $0x4] sm:$0xf] %v222
                  %v224 = vld [vmem:[%s218 + $0x10] sm:$0xf]
                  %225 = vst [vmem:[%s219 + $0x8] sm:$0xf] %v224
                  %v226 = vld [vmem:[%s218 + $0x18] sm:$0xf]
                  %227 = vst [vmem:[%s219 + $0xc] sm:$0xf] %v226
                  %v228 = vld [vmem:[%s218 + $0x20] sm:$0xf]
                  %229 = vst [vmem:[%s219 + $0x10] sm:$0xf] %v228
                  %v230 = vld [vmem:[%s218 + $0x28] sm:$0xf]
                  %231 = vst [vmem:[%s219 + $0x14] sm:$0xf] %v230
                  %v232 = vld [vmem:[%s218 + $0x30] sm:$0xf]
                  %233 = vst [vmem:[%s219 + $0x18] sm:$0xf] %v232
                  %v234 = vld [vmem:[%s218 + $0x38] sm:$0xf]
                  %235 = vst [vmem:[%s219 + $0x1c] sm:$0xf] %v234
                  %v236 = vld [vmem:[%s218 + $0x40] sm:$0xf]
                  %237 = vst [vmem:[%s219 + $0x20] sm:$0xf] %v236
                  %v238 = vld [vmem:[%s218 + $0x48] sm:$0xf]
                  %239 = vst [vmem:[%s219 + $0x24] sm:$0xf] %v238
                  %v240 = vld [vmem:[%s218 + $0x50] sm:$0xf]
                  %241 = vst [vmem:[%s219 + $0x28] sm:$0xf] %v240
                  %v242 = vld [vmem:[%s218 + $0x58] sm:$0xf]
                  %243 = vst [vmem:[%s219 + $0x2c] sm:$0xf] %v242
                  %v244 = vld [vmem:[%s218 + $0x60] sm:$0xf]
                  %245 = vst [vmem:[%s219 + $0x30] sm:$0xf] %v244
                  %v246 = vld [vmem:[%s218 + $0x68] sm:$0xf]
                  %247 = vst [vmem:[%s219 + $0x34] sm:$0xf] %v246
                  %v248 = vld [vmem:[%s218 + $0x70] sm:$0xf]
                  %249 = vst [vmem:[%s219 + $0x38] sm:$0xf] %v248
                  %v250 = vld [vmem:[%s218 + $0x78] sm:$0xf]
                  %251 = vst [vmem:[%s219 + $0x3c] sm:$0xf] %v250
                $region63: #{seal_gcn_forward.6} parent=50 // loop_footer
                  %s217 = sadd.s32 1, %s213
                $region64: #{seal_gcn_forward.6} parent=50 // loop_footer_branch
                  %212 = sbr.rel target = $region60
                $region65: #{seal_gcn_forward.6} parent=50 // loop_exit
                  _
              $region51: #{seal_gcn_forward.6} parent=35 // pred_fallthru
                _
            $region36: #{seal_gcn_forward.6} parent=31 // pred_fallthru
              _
            // Predicated region
            $region37: #{seal_gcn_forward.6} parent=31 // pred_check
              _
            $region38: #{seal_gcn_forward.6} parent=31 // pred_check_branch
              %159 = sbr.rel (0) target = $region40
            $region39: #{seal_gcn_forward.6} parent=31 // pred_region
              loop: start=0, step=1, limit=1
              $region41: #{seal_gcn_forward.6} parent=39 // loop_pre_header
                _
              $region42: #{seal_gcn_forward.6} parent=39 // loop_header
                %s162 = sphi 0, %s166
                %p163 = scmp.ge.s32.totalorder %s162, 1
                %s167 = sphi %s153, %s153
                %s168 = sphi %s148, %s148
              $region43: #{seal_gcn_forward.6} parent=39 // loop_header_branch
                %165 = sbr.rel (%p163) target = $region47
              $region44: #{seal_gcn_forward.6} parent=39 // loop_body
                %v169 = vld [vmem:[%s167] sm:$0xf]
                %170 = vst [vmem:[%s168] sm:$0xf] %v169
                %v171 = vld [vmem:[%s167 + $0x8] sm:$0xf]
                %172 = vst [vmem:[%s168 + $0x4] sm:$0xf] %v171
                %v173 = vld [vmem:[%s167 + $0x10] sm:$0xf]
                %174 = vst [vmem:[%s168 + $0x8] sm:$0xf] %v173
                %v175 = vld [vmem:[%s167 + $0x18] sm:$0xf]
                %176 = vst [vmem:[%s168 + $0xc] sm:$0xf] %v175
                %v177 = vld [vmem:[%s167 + $0x20] sm:$0xf]
                %178 = vst [vmem:[%s168 + $0x10] sm:$0xf] %v177
                %v179 = vld [vmem:[%s167 + $0x28] sm:$0xf]
                %180 = vst [vmem:[%s168 + $0x14] sm:$0xf] %v179
                %v181 = vld [vmem:[%s167 + $0x30] sm:$0xf]
                %182 = vst [vmem:[%s168 + $0x18] sm:$0xf] %v181
                %v183 = vld [vmem:[%s167 + $0x38] sm:$0xf]
                %184 = vst [vmem:[%s168 + $0x1c] sm:$0xf] %v183
                %v185 = vld [vmem:[%s167 + $0x40] sm:$0xf]
                %186 = vst [vmem:[%s168 + $0x20] sm:$0xf] %v185
                %v187 = vld [vmem:[%s167 + $0x48] sm:$0xf]
                %188 = vst [vmem:[%s168 + $0x24] sm:$0xf] %v187
                %v189 = vld [vmem:[%s167 + $0x50] sm:$0xf]
                %190 = vst [vmem:[%s168 + $0x28] sm:$0xf] %v189
                %v191 = vld [vmem:[%s167 + $0x58] sm:$0xf]
                %192 = vst [vmem:[%s168 + $0x2c] sm:$0xf] %v191
                %v193 = vld [vmem:[%s167 + $0x60] sm:$0xf]
                %194 = vst [vmem:[%s168 + $0x30] sm:$0xf] %v193
                %v195 = vld [vmem:[%s167 + $0x68] sm:$0xf]
                %196 = vst [vmem:[%s168 + $0x34] sm:$0xf] %v195
                %v197 = vld [vmem:[%s167 + $0x70] sm:$0xf]
                %198 = vst [vmem:[%s168 + $0x38] sm:$0xf] %v197
                %v199 = vld [vmem:[%s167 + $0x78] sm:$0xf]
                %200 = vst [vmem:[%s168 + $0x3c] sm:$0xf] %v199
              $region45: #{seal_gcn_forward.6} parent=39 // loop_footer
                %s166 = sadd.s32 1, %s162
              $region46: #{seal_gcn_forward.6} parent=39 // loop_footer_branch
                %161 = sbr.rel target = $region42
              $region47: #{seal_gcn_forward.6} parent=39 // loop_exit
                _
            $region40: #{seal_gcn_forward.6} parent=31 // pred_fallthru
              _
          $region32: #{seal_gcn_forward.6} parent=27 // pred_fallthru
            _
          %252 = vnop
        $region28: #{seal_gcn_forward.6} parent=23 // pred_fallthru
          _
      $region24: #{seal_gcn_forward.6} parent=5 // pred_fallthru
        _
      %p253 = scmp.le.s32.totalorder 1, %s9
      %p254 = scmp.lt.s32.totalorder %s9, 5
      %p255 = pnand %p253, %p254
      %p256 = pneg %p255
      // Predicated region
      $region66: #{seal_gcn_forward.6} parent=5 // pred_check
        _
      $region67: #{seal_gcn_forward.6} parent=5 // pred_check_branch
        %258 = sbr.rel (%p255) target = $region69
      $region68: #{seal_gcn_forward.6} parent=5 // pred_region
        %s259 = ssub.s32 %s9, 1
        %s260 = sand.u32 %s36, 1
        %s261 = sand.u32 %s36, 1
        %s262 = smul.addr %s261, 64
        %s263 = scalar_lea.vmem [#allocation3], %s262
        // Predicated region
        $region70: #{seal_gcn_forward.6} parent=68 // pred_check
          %p264 = pneg %p49
        $region71: #{seal_gcn_forward.6} parent=68 // pred_check_branch
          %266 = sbr.rel (%p264) target = $region73
        $region72: #{seal_gcn_forward.6} parent=68 // pred_region
          _
        $region73: #{seal_gcn_forward.6} parent=68 // pred_fallthru
          _
        %s267 = sand.u32 %s36, 1
        %s268 = sand.u32 %s36, 1
        %s269 = smul.addr %s268, 64
        %s270 = scalar_lea.vmem [#allocation3], %s269
        %p271 = pneg %p49
        %p272 = pneg %p46
        %p273 = pneg %p70
        %p274 = pneg %p67
        %p275 = pneg %p91
        %p276 = pneg %p88
        %p277 = pneg %p117
        %p278 = pneg %p114
        %s279 = smul.u32 16, %s18
        %p280 = scmp.lt.s32.totalorder %s279, 31
        %s281 = scalar_select %p280, %s279, 31
        %s282 = smul.addr %s281, 4
        %s283 = scalar_lea.vmem %s3, %s282
        %s284 = smul.u32 16, %s18
        %s285 = smul.u32 16, %s18
        %p286 = scmp.lt.s32.totalorder %s285, 31
        %s287 = scalar_select %p286, %s285, 31
        %s288 = smul.addr %s287, 4
        %s289 = scalar_lea.vmem %s3, %s288
        %s290 = smul.u32 16, %s18
        %p292 = scmp.eq.s32.totalorder %s19, 0
        // Predicated region
        $region74: #{seal_gcn_forward.6} parent=68 // pred_check
          %p293 = pneg %p292
        $region75: #{seal_gcn_forward.6} parent=68 // pred_check_branch
          %295 = sbr.rel (%p293) target = $region77
        $region76: #{seal_gcn_forward.6} parent=68 // pred_region
          %296 = vst [vmem:[#allocation2] sm:$0xff] 0.0
          %297 = vst [vmem:[#allocation2 + $0x8] sm:$0xff] 0.0
          %298 = vst [vmem:[#allocation2 + $0x10] sm:$0xff] 0.0
          %299 = vst [vmem:[#allocation2 + $0x18] sm:$0xff] 0.0
          %300 = vst [vmem:[#allocation2 + $0x20] sm:$0xff] 0.0
          %301 = vst [vmem:[#allocation2 + $0x28] sm:$0xff] 0.0
          %302 = vst [vmem:[#allocation2 + $0x30] sm:$0xff] 0.0
          %303 = vst [vmem:[#allocation2 + $0x38] sm:$0xff] 0.0
          %304 = vst [vmem:[#allocation2 + $0x40] sm:$0xff] 0.0
          %305 = vst [vmem:[#allocation2 + $0x48] sm:$0xff] 0.0
          %306 = vst [vmem:[#allocation2 + $0x50] sm:$0xff] 0.0
          %307 = vst [vmem:[#allocation2 + $0x58] sm:$0xff] 0.0
          %308 = vst [vmem:[#allocation2 + $0x60] sm:$0xff] 0.0
          %309 = vst [vmem:[#allocation2 + $0x68] sm:$0xff] 0.0
          %310 = vst [vmem:[#allocation2 + $0x70] sm:$0xff] 0.0
          %311 = vst [vmem:[#allocation2 + $0x78] sm:$0xff] 0.0
        $region77: #{seal_gcn_forward.6} parent=68 // pred_fallthru
          _
        %s312 = smul.u32 %s19, 128
        %v313 = vld [vmem:[#allocation2] sm:$0xff]
        %v314 = vld [vmem:[#allocation2 + $0x8] sm:$0xff]
        %v315 = vld [vmem:[#allocation2 + $0x10] sm:$0xff]
        %v316 = vld [vmem:[#allocation2 + $0x18] sm:$0xff]
        %v317 = vld [vmem:[#allocation2 + $0x20] sm:$0xff]
        %v318 = vld [vmem:[#allocation2 + $0x28] sm:$0xff]
        %v319 = vld [vmem:[#allocation2 + $0x30] sm:$0xff]
        %v320 = vld [vmem:[#allocation2 + $0x38] sm:$0xff]
        %v321 = vld [vmem:[#allocation2 + $0x40] sm:$0xff]
        %v322 = vld [vmem:[#allocation2 + $0x48] sm:$0xff]
        %v323 = vld [vmem:[#allocation2 + $0x50] sm:$0xff]
        %v324 = vld [vmem:[#allocation2 + $0x58] sm:$0xff]
        %v325 = vld [vmem:[#allocation2 + $0x60] sm:$0xff]
        %v326 = vld [vmem:[#allocation2 + $0x68] sm:$0xff]
        %v327 = vld [vmem:[#allocation2 + $0x70] sm:$0xff]
        %v328 = vld [vmem:[#allocation2 + $0x78] sm:$0xff]
        %v329 = vld [vmem:[%s263] sm:$0xf]
        %v330 = vld [vmem:[%s263 + $0x4] sm:$0xf]
        %v331 = vld [vmem:[%s263 + $0x8] sm:$0xf]
        %v332 = vld [vmem:[%s263 + $0xc] sm:$0xf]
        %v333 = vld [vmem:[%s263 + $0x10] sm:$0xf]
        %v334 = vld [vmem:[%s263 + $0x14] sm:$0xf]
        %v335 = vld [vmem:[%s263 + $0x18] sm:$0xf]
        %v336 = vld [vmem:[%s263 + $0x1c] sm:$0xf]
        %v337 = vld [vmem:[%s263 + $0x20] sm:$0xf]
        %v338 = vld [vmem:[%s263 + $0x24] sm:$0xf]
        %v339 = vld [vmem:[%s263 + $0x28] sm:$0xf]
        %v340 = vld [vmem:[%s263 + $0x2c] sm:$0xf]
        %v341 = vld [vmem:[%s263 + $0x30] sm:$0xf]
        %v342 = vld [vmem:[%s263 + $0x34] sm:$0xf]
        %v343 = vld [vmem:[%s263 + $0x38] sm:$0xf]
        %v344 = vld [vmem:[%s263 + $0x3c] sm:$0xf]
        %s345 = sshra.s32 %s312, 3
        %s346 = sand.u32 %s312, 7
        %s347 = smul.addr %s345, 4
        %s348 = scalar_lea.vmem %s1, %s347
        %v349 = vld [vmem:[%s348] sm:$0xf]
        %v350 = vld [vmem:[%s348 + $0x4] sm:$0xf]
        %v351 = vld [vmem:[%s348 + $0x8] sm:$0xf]
        %v352 = vld [vmem:[%s348 + $0xc] sm:$0xf]
        %v353 = vld [vmem:[%s348 + $0x10] sm:$0xf]
        %v354 = vld [vmem:[%s348 + $0x14] sm:$0xf]
        %v355 = vld [vmem:[%s348 + $0x18] sm:$0xf]
        %v356 = vld [vmem:[%s348 + $0x1c] sm:$0xf]
        %v357 = vld [vmem:[%s348 + $0x20] sm:$0xf]
        %v358 = vld [vmem:[%s348 + $0x24] sm:$0xf]
        %v359 = vld [vmem:[%s348 + $0x28] sm:$0xf]
        %v360 = vld [vmem:[%s348 + $0x2c] sm:$0xf]
        %v361 = vld [vmem:[%s348 + $0x30] sm:$0xf]
        %v362 = vld [vmem:[%s348 + $0x34] sm:$0xf]
        %v363 = vld [vmem:[%s348 + $0x38] sm:$0xf]
        %v364 = vld [vmem:[%s348 + $0x3c] sm:$0xf]
        %v381 = vunpack.c.l.b16 %v329
        %v382 = vunpack.c.l.b16 %v330
        %v383 = vunpack.c.l.b16 %v331
        %v384 = vunpack.c.l.b16 %v332
        %v385 = vunpack.c.l.b16 %v333
        %v386 = vunpack.c.l.b16 %v334
        %v387 = vunpack.c.l.b16 %v335
        %v388 = vunpack.c.l.b16 %v336
        %v389 = vunpack.c.l.b16 %v337
        %v390 = vunpack.c.l.b16 %v338
        %v391 = vunpack.c.l.b16 %v339
        %v392 = vunpack.c.l.b16 %v340
        %v393 = vunpack.c.l.b16 %v341
        %v394 = vunpack.c.l.b16 %v342
        %v395 = vunpack.c.l.b16 %v343
        %v396 = vunpack.c.l.b16 %v344
        %v397 = vpack.c.b16 %v382, %v381
        %v398 = vpack.c.b16 %v384, %v383
        %v399 = vpack.c.b16 %v386, %v385
        %v400 = vpack.c.b16 %v388, %v387
        %v401 = vpack.c.b16 %v390, %v389
        %v402 = vpack.c.b16 %v392, %v391
        %v403 = vpack.c.b16 %v394, %v393
        %v404 = vpack.c.b16 %v396, %v395
        %v429 = vunpack.c.l.b16 %v349
        %v430 = vunpack.c.l.b16 %v350
        %v431 = vunpack.c.l.b16 %v351
        %v432 = vunpack.c.l.b16 %v352
        %v433 = vunpack.c.l.b16 %v353
        %v434 = vunpack.c.l.b16 %v354
        %v435 = vunpack.c.l.b16 %v355
        %v436 = vunpack.c.l.b16 %v356
        %v437 = vunpack.c.l.b16 %v357
        %v438 = vunpack.c.l.b16 %v358
        %v439 = vunpack.c.l.b16 %v359
        %v440 = vunpack.c.l.b16 %v360
        %v441 = vunpack.c.l.b16 %v361
        %v442 = vunpack.c.l.b16 %v362
        %v443 = vunpack.c.l.b16 %v363
        %v444 = vunpack.c.l.b16 %v364
        %v445 = vpack.c.b16 %v430, %v429
        %v446 = vpack.c.b16 %v432, %v431
        %v447 = vpack.c.b16 %v434, %v433
        %v448 = vpack.c.b16 %v436, %v435
        %v449 = vpack.c.b16 %v438, %v437
        %v450 = vpack.c.b16 %v440, %v439
        %v451 = vpack.c.b16 %v442, %v441
        %v452 = vpack.c.b16 %v444, %v443
        %461 = vmatprep.subr.bf16.mxu0 0
        %462 = vmatpush1.bf16.msra.mxu0 %v445
        %463 = vmatprep.subr.bf16.mxu0 0
        %464 = vmatpush1.bf16.msra.mxu0 %v446
        %465 = vmatprep.subr.bf16.mxu0 0
        %466 = vmatpush1.bf16.msra.mxu0 %v447
        %467 = vmatprep.subr.bf16.mxu0 0
        %468 = vmatpush1.bf16.msra.mxu0 %v448
        %469 = vmatprep.subr.bf16.mxu0 0
        %470 = vmatpush1.bf16.msra.mxu0 %v449
        %471 = vmatprep.subr.bf16.mxu0 0
        %472 = vmatpush1.bf16.msra.mxu0 %v450
        %473 = vmatprep.subr.bf16.mxu0 0
        %474 = vmatpush1.bf16.msra.mxu0 %v451
        %475 = vmatprep.subr.bf16.mxu0 0
        %476 = vmatpush1.bf16.msra.mxu0 %v452
        %477 = vmatprep.subr.bf16.mxu0 0
        %478 = vmatpush1.bf16.msra.mxu0 0
        %479 = vmatprep.subr.bf16.mxu0 0
        %480 = vmatpush1.bf16.msra.mxu0 0
        %481 = vmatprep.subr.bf16.mxu0 0
        %482 = vmatpush1.bf16.msra.mxu0 0
        %483 = vmatprep.subr.bf16.mxu0 0
        %484 = vmatpush1.bf16.msra.mxu0 0
        %485 = vmatprep.subr.bf16.mxu0 0
        %486 = vmatpush1.bf16.msra.mxu0 0
        %487 = vmatprep.subr.bf16.mxu0 0
        %488 = vmatpush1.bf16.msra.mxu0 0
        %489 = vmatprep.subr.bf16.mxu0 0
        %490 = vmatpush1.bf16.msra.mxu0 0
        %491 = vmatprep.subr.bf16.mxu0 0
        %492 = vmatpush1.bf16.msra.mxu0 0
        %493 = vmatprep.mubr.bf16.mxu0 0
        %494 = vmatmul.mubr.bf16.gmra.mrb[0].mxu0 %v397
        %v495 = vpop.f32.mrb[0].mxu0
        %v496 = vadd.f32 0.0, %v495
        %v497 = vpop.f32.mrb[0].mxu0
        %v498 = vpop.f32.mrb[0].mxu0
        %v499 = vadd.f32 0.0, %v498
        %v500 = vpop.f32.mrb[0].mxu0
        %501 = vmatprep.mubr.bf16.mxu0 0
        %502 = vmatmul.mubr.bf16.gmra.mrb[0].mxu0 %v398
        %v503 = vpop.f32.mrb[0].mxu0
        %v504 = vadd.f32 0.0, %v503
        %v505 = vpop.f32.mrb[0].mxu0
        %v506 = vpop.f32.mrb[0].mxu0
        %v507 = vadd.f32 0.0, %v506
        %v508 = vpop.f32.mrb[0].mxu0
        %509 = vmatprep.mubr.bf16.mxu0 0
        %510 = vmatmul.mubr.bf16.gmra.mrb[0].mxu0 %v399
        %v511 = vpop.f32.mrb[0].mxu0
        %v512 = vadd.f32 0.0, %v511
        %v513 = vpop.f32.mrb[0].mxu0
        %v514 = vpop.f32.mrb[0].mxu0
        %v515 = vadd.f32 0.0, %v514
        %v516 = vpop.f32.mrb[0].mxu0
        %517 = vmatprep.mubr.bf16.mxu0 0
        %518 = vmatmul.mubr.bf16.gmra.mrb[0].mxu0 %v400
        %v519 = vpop.f32.mrb[0].mxu0
        %v520 = vadd.f32 0.0, %v519
        %v521 = vpop.f32.mrb[0].mxu0
        %v522 = vpop.f32.mrb[0].mxu0
        %v523 = vadd.f32 0.0, %v522
        %v524 = vpop.f32.mrb[0].mxu0
        %525 = vmatprep.mubr.bf16.mxu0 0
        %526 = vmatmul.mubr.bf16.gmra.mrb[0].mxu0 %v401
        %v527 = vpop.f32.mrb[0].mxu0
        %v528 = vadd.f32 0.0, %v527
        %v529 = vpop.f32.mrb[0].mxu0
        %v530 = vpop.f32.mrb[0].mxu0
        %v531 = vadd.f32 0.0, %v530
        %v532 = vpop.f32.mrb[0].mxu0
        %533 = vmatprep.mubr.bf16.mxu0 0
        %534 = vmatmul.mubr.bf16.gmra.mrb[0].mxu0 %v402
        %v535 = vpop.f32.mrb[0].mxu0
        %v536 = vadd.f32 0.0, %v535
        %v537 = vpop.f32.mrb[0].mxu0
        %v538 = vpop.f32.mrb[0].mxu0
        %v539 = vadd.f32 0.0, %v538
        %v540 = vpop.f32.mrb[0].mxu0
        %541 = vmatprep.mubr.bf16.mxu0 0
        %542 = vmatmul.mubr.bf16.gmra.mrb[0].mxu0 %v403
        %v543 = vpop.f32.mrb[0].mxu0
        %v544 = vadd.f32 0.0, %v543
        %v545 = vpop.f32.mrb[0].mxu0
        %v546 = vpop.f32.mrb[0].mxu0
        %v547 = vadd.f32 0.0, %v546
        %v548 = vpop.f32.mrb[0].mxu0
        %549 = vmatprep.mubr.bf16.mxu0 0
        %550 = vmatmul.mubr.bf16.gmra.mrb[0].mxu0 %v404
        %v551 = vpop.f32.mrb[0].mxu0
        %v552 = vadd.f32 0.0, %v551
        %v553 = vpop.f32.mrb[0].mxu0
        %v554 = vpop.f32.mrb[0].mxu0
        %v555 = vadd.f32 0.0, %v554
        %v556 = vpop.f32.mrb[0].mxu0
        %557 = vdwg.mxu0
        %v558 = vadd.f32 %v313, %v496
        %v559 = vadd.f32 %v314, %v499
        %v560 = vadd.f32 %v315, %v504
        %v561 = vadd.f32 %v316, %v507
        %v562 = vadd.f32 %v317, %v512
        %v563 = vadd.f32 %v318, %v515
        %v564 = vadd.f32 %v319, %v520
        %v565 = vadd.f32 %v320, %v523
        %v566 = vadd.f32 %v321, %v528
        %v567 = vadd.f32 %v322, %v531
        %v568 = vadd.f32 %v323, %v536
        %v569 = vadd.f32 %v324, %v539
        %v570 = vadd.f32 %v325, %v544
        %v571 = vadd.f32 %v326, %v547
        %v572 = vadd.f32 %v327, %v552
        %v573 = vadd.f32 %v328, %v555
        %574 = vst [vmem:[#allocation2] sm:$0xff] %v558
        %575 = vst [vmem:[#allocation2 + $0x8] sm:$0xff] %v559
        %576 = vst [vmem:[#allocation2 + $0x10] sm:$0xff] %v560
        %577 = vst [vmem:[#allocation2 + $0x18] sm:$0xff] %v561
        %578 = vst [vmem:[#allocation2 + $0x20] sm:$0xff] %v562
        %579 = vst [vmem:[#allocation2 + $0x28] sm:$0xff] %v563
        %580 = vst [vmem:[#allocation2 + $0x30] sm:$0xff] %v564
        %581 = vst [vmem:[#allocation2 + $0x38] sm:$0xff] %v565
        %582 = vst [vmem:[#allocation2 + $0x40] sm:$0xff] %v566
        %583 = vst [vmem:[#allocation2 + $0x48] sm:$0xff] %v567
        %584 = vst [vmem:[#allocation2 + $0x50] sm:$0xff] %v568
        %585 = vst [vmem:[#allocation2 + $0x58] sm:$0xff] %v569
        %586 = vst [vmem:[#allocation2 + $0x60] sm:$0xff] %v570
        %587 = vst [vmem:[#allocation2 + $0x68] sm:$0xff] %v571
        %588 = vst [vmem:[#allocation2 + $0x70] sm:$0xff] %v572
        %589 = vst [vmem:[#allocation2 + $0x78] sm:$0xff] %v573
        %p590 = scmp.eq.s32.totalorder %s19, 1
        // Predicated region
        $region78: #{seal_gcn_forward.6} parent=68 // pred_check
          %p591 = pneg %p590
        $region79: #{seal_gcn_forward.6} parent=68 // pred_check_branch
          %593 = sbr.rel (%p591) target = $region81
        $region80: #{seal_gcn_forward.6} parent=68 // pred_region
          %v594 = vld [vmem:[#allocation2] sm:$0xff]
          %v595 = vld [vmem:[#allocation2 + $0x8] sm:$0xff]
          %v596 = vld [vmem:[#allocation2 + $0x10] sm:$0xff]
          %v597 = vld [vmem:[#allocation2 + $0x18] sm:$0xff]
          %v598 = vld [vmem:[#allocation2 + $0x20] sm:$0xff]
          %v599 = vld [vmem:[#allocation2 + $0x28] sm:$0xff]
          %v600 = vld [vmem:[#allocation2 + $0x30] sm:$0xff]
          %v601 = vld [vmem:[#allocation2 + $0x38] sm:$0xff]
          %v602 = vld [vmem:[#allocation2 + $0x40] sm:$0xff]
          %v603 = vld [vmem:[#allocation2 + $0x48] sm:$0xff]
          %v604 = vld [vmem:[#allocation2 + $0x50] sm:$0xff]
          %v605 = vld [vmem:[#allocation2 + $0x58] sm:$0xff]
          %v606 = vld [vmem:[#allocation2 + $0x60] sm:$0xff]
          %v607 = vld [vmem:[#allocation2 + $0x68] sm:$0xff]
          %v608 = vld [vmem:[#allocation2 + $0x70] sm:$0xff]
          %v609 = vld [vmem:[#allocation2 + $0x78] sm:$0xff]
          %v610 = vld [vmem:[%s2] sm:$0x1]
          %v612 = vlaneseq
          %v613 = vshrl.u32 %v612, 7
          %v614 = vsub.s32 0, %v613
          %v615 = vrot.slane %v610, %v614
          %v617 = vadd.f32 %v594, %v615
          %v618 = vadd.f32 %v595, %v615
          %v619 = vadd.f32 %v596, %v615
          %v620 = vadd.f32 %v597, %v615
          %v621 = vadd.f32 %v598, %v615
          %v622 = vadd.f32 %v599, %v615
          %v623 = vadd.f32 %v600, %v615
          %v624 = vadd.f32 %v601, %v615
          %v625 = vadd.f32 %v602, %v615
          %v626 = vadd.f32 %v603, %v615
          %v627 = vadd.f32 %v604, %v615
          %v628 = vadd.f32 %v605, %v615
          %v629 = vadd.f32 %v606, %v615
          %v630 = vadd.f32 %v607, %v615
          %v631 = vadd.f32 %v608, %v615
          %v632 = vadd.f32 %v609, %v615
          %v633 = vmax.f32 %v617, 0.0
          %v634 = vmax.f32 %v618, 0.0
          %v635 = vmax.f32 %v619, 0.0
          %v636 = vmax.f32 %v620, 0.0
          %v637 = vmax.f32 %v621, 0.0
          %v638 = vmax.f32 %v622, 0.0
          %v639 = vmax.f32 %v623, 0.0
          %v640 = vmax.f32 %v624, 0.0
          %v641 = vmax.f32 %v625, 0.0
          %v642 = vmax.f32 %v626, 0.0
          %v643 = vmax.f32 %v627, 0.0
          %v644 = vmax.f32 %v628, 0.0
          %v645 = vmax.f32 %v629, 0.0
          %v646 = vmax.f32 %v630, 0.0
          %v647 = vmax.f32 %v631, 0.0
          %v648 = vmax.f32 %v632, 0.0
          %v649 = vpack.c.bf16 %v634, %v633
          %v650 = vpack.c.bf16 %v636, %v635
          %v651 = vpack.c.bf16 %v638, %v637
          %v652 = vpack.c.bf16 %v640, %v639
          %v653 = vpack.c.bf16 %v642, %v641
          %v654 = vpack.c.bf16 %v644, %v643
          %v655 = vpack.c.bf16 %v646, %v645
          %v656 = vpack.c.bf16 %v648, %v647
          %v665 = vunpack.c.l.b16 %v649
          %v666 = vunpack.c.h.b16 %v649
          %v667 = vunpack.c.l.b16 %v650
          %v668 = vunpack.c.h.b16 %v650
          %v669 = vunpack.c.l.b16 %v651
          %v670 = vunpack.c.h.b16 %v651
          %v671 = vunpack.c.l.b16 %v652
          %v672 = vunpack.c.h.b16 %v652
          %v673 = vunpack.c.l.b16 %v653
          %v674 = vunpack.c.h.b16 %v653
          %v675 = vunpack.c.l.b16 %v654
          %v676 = vunpack.c.h.b16 %v654
          %v677 = vunpack.c.l.b16 %v655
          %v678 = vunpack.c.h.b16 %v655
          %v679 = vunpack.c.l.b16 %v656
          %v680 = vunpack.c.h.b16 %v656
          %v681 = vpack.c.b16 %v665, %v665
          %v682 = vpack.c.b16 %v666, %v666
          %v683 = vpack.c.b16 %v667, %v667
          %v684 = vpack.c.b16 %v668, %v668
          %v685 = vpack.c.b16 %v669, %v669
          %v686 = vpack.c.b16 %v670, %v670
          %v687 = vpack.c.b16 %v671, %v671
          %v688 = vpack.c.b16 %v672, %v672
          %v689 = vpack.c.b16 %v673, %v673
          %v690 = vpack.c.b16 %v674, %v674
          %v691 = vpack.c.b16 %v675, %v675
          %v692 = vpack.c.b16 %v676, %v676
          %v693 = vpack.c.b16 %v677, %v677
          %v694 = vpack.c.b16 %v678, %v678
          %v695 = vpack.c.b16 %v679, %v679
          %v696 = vpack.c.b16 %v680, %v680
          %713 = vst [vmem:[%s289] sm:$0xf] %v681
          %714 = vst [vmem:[%s289 + $0x4] sm:$0xf] %v682
          %715 = vst [vmem:[%s289 + $0x8] sm:$0xf] %v683
          %716 = vst [vmem:[%s289 + $0xc] sm:$0xf] %v684
          %717 = vst [vmem:[%s289 + $0x10] sm:$0xf] %v685
          %718 = vst [vmem:[%s289 + $0x14] sm:$0xf] %v686
          %719 = vst [vmem:[%s289 + $0x18] sm:$0xf] %v687
          %720 = vst [vmem:[%s289 + $0x1c] sm:$0xf] %v688
          %721 = vst [vmem:[%s289 + $0x20] sm:$0xf] %v689
          %722 = vst [vmem:[%s289 + $0x24] sm:$0xf] %v690
          %723 = vst [vmem:[%s289 + $0x28] sm:$0xf] %v691
          %724 = vst [vmem:[%s289 + $0x2c] sm:$0xf] %v692
          %725 = vst [vmem:[%s289 + $0x30] sm:$0xf] %v693
          %726 = vst [vmem:[%s289 + $0x34] sm:$0xf] %v694
          %727 = vst [vmem:[%s289 + $0x38] sm:$0xf] %v695
          %728 = vst [vmem:[%s289 + $0x3c] sm:$0xf] %v696
        $region81: #{seal_gcn_forward.6} parent=68 // pred_fallthru
          _
        %s729 = smul.u32 16, %s18
        %p730 = scmp.lt.s32.totalorder %s729, 31
        %s731 = scalar_select %p730, %s729, 31
        %s732 = smul.addr %s731, 4
        %s733 = scalar_lea.vmem %s3, %s732
        // Predicated region
        $region82: #{seal_gcn_forward.6} parent=68 // pred_check
          %p734 = pneg %p114
        $region83: #{seal_gcn_forward.6} parent=68 // pred_check_branch
          %736 = sbr.rel (%p734) target = $region85
        $region84: #{seal_gcn_forward.6} parent=68 // pred_region
          %s737 = smul.u32 16, %s18
        $region85: #{seal_gcn_forward.6} parent=68 // pred_fallthru
          _
      $region69: #{seal_gcn_forward.6} parent=5 // pred_fallthru
        _
      %p738 = scmp.le.s32.totalorder 2, %s9
      // Predicated region
      $region86: #{seal_gcn_forward.6} parent=5 // pred_check
        %p739 = pneg %p738
      $region87: #{seal_gcn_forward.6} parent=5 // pred_check_branch
        %741 = sbr.rel (%p739) target = $region89
      $region88: #{seal_gcn_forward.6} parent=5 // pred_region
        %s742 = ssub.s32 %s9, 2
        // Predicated region
        $region90: #{seal_gcn_forward.6} parent=88 // pred_check
          %p743 = pneg %p120
        $region91: #{seal_gcn_forward.6} parent=88 // pred_check_branch
          %745 = sbr.rel (%p743) target = $region93
        $region92: #{seal_gcn_forward.6} parent=88 // pred_region
          %s746 = smul.u32 16, %s20
          %p747 = scmp.lt.s32.totalorder %s746, 31
          %s748 = scalar_select %p747, %s746, 31
          %s749 = smul.addr %s748, 4
          %s750 = scalar_lea.vmem %s3, %s749
        $region93: #{seal_gcn_forward.6} parent=88 // pred_fallthru
          _
      $region89: #{seal_gcn_forward.6} parent=5 // pred_fallthru
        _
    $region6: #{seal_gcn_forward.6} parent=1 // loop_footer
      %s13 = sadd.s32 1, %s9
    $region7: #{seal_gcn_forward.6} parent=1 // loop_footer_branch
      %8 = sbr.rel target = $region3
    $region8: #{seal_gcn_forward.6} parent=1 // loop_exit
      _

// kernel: seal_gcn_forward.8
$region0: #{seal_gcn_forward.8}
  #allocation0 [shape = 'u32[]', space=smem, size = 0x4, offset = 0x4, fixed_abs, tag = 'smem constant byte address 0x4 - core index']
  #allocation1 [shape = 'u32[144,128]{1,0:T(1,128)}', space=vmem, size = 0x12000, scoped, tag = 'internal scratch']
  #allocation2 [shape = 'f32[128,128]{1,0:T(8,128)}', space=vmem, size = 0x10000, scoped, tag = 'scratch operand']
  %s0 = inlined_call_operand.vmem [shape: bf16[256,256], index: 0, kind: input, shape index: {}]
  %s1 = inlined_call_operand.vmem [shape: bf16[256,128], index: 1, kind: input, shape index: {}]
  %s2 = inlined_call_operand.vmem [shape: f32[1,128], index: 2, kind: input, shape index: {}]
  %s3 = inlined_call_operand.vmem [shape: bf16[256,128], index: 3, kind: output, shape index: {}]
  %s4 = sld [smem:[#allocation0]]
  $region94: #{seal_gcn_forward.8} parent=0
    _
  %s6 = ssub.s32 1, %s4
  %s7 = scalar_select 0, %s6, %s4
  $region1: #{seal_gcn_forward.8} parent=0
    #allocation3 [shape = 'u8[65536]{0}', space=vmem, size = 0x10000, scoped, tag = 'input window, operand 0']
    loop: start=0, step=1, limit=6
    $region2: #{seal_gcn_forward.8} parent=1 // loop_pre_header
      _
    $region3: #{seal_gcn_forward.8} parent=1 // loop_header
      %s9 = sphi 0, %s13
      %p10 = scmp.ge.s32.totalorder %s9, 6
      %s16 = sphi 0, %s28
      %s17 = sphi 0, %s24
      %s18 = sphi 0, %s16
      %s19 = sphi 0, %s17
      %s20 = sphi 0, %s18
      %s21 = sphi 0, %s19
      %s33 = sphi 0, %s35
      %s36 = sphi 0, %s33
      %s37 = sphi 0, %s36
      %s53 = sphi 0, %s37
      %s57 = sphi 0, %s57
      %s59 = sphi 0, %s57
      %s60 = sphi 0, %s59
      %s74 = sphi 0, %s60
      %s78 = sphi 0, %s78
      %s80 = sphi 0, %s78
      %s81 = sphi 0, %s80
      %s95 = sphi 0, %s81
      %s101 = sphi 0, %s103
      %s104 = sphi 0, %s101
      %s105 = sphi 0, %s104
      %s121 = sphi 0, %s105
    $region4: #{seal_gcn_forward.8} parent=1 // loop_header_branch
      %12 = sbr.rel (%p10) target = $region8
    $region5: #{seal_gcn_forward.8} parent=1 // loop_body
      %s14 = ssub.s32 %s9, 1
      %s15 = ssub.s32 %s9, 2
      %s22 = sadd.s32 1, %s17
      %p23 = scmp.ge.s32.totalorder %s22, 2
      %s24 = scalar_select %p23, 0, %s22
      %s25 = sadd.s32 1, %s16
      %s26 = scalar_select %p23, %s25, %s16
      %p27 = scmp.ge.s32.totalorder %s26, 2
      %s28 = scalar_select %p27, 0, %s26
      %s29 = ssub.s32 %s16, %s28
      %s30 = ssub.s32 %s17, %s24
      %s31 = sor.u32 %s29, %s30
      %p32 = scmp.eq.s32.totalorder %s31, 0
      %s34 = sadd.s32 %s33, 1
      %s35 = scalar_select %p32, %s33, %s34
      %p38 = pneg %p32
      %p39 = scmp.eq.s32.totalorder %s9, 3
      %p40 = por %p38, %p39
      %p41 = scmp.ne.s32.totalorder %s33, %s36
      %p42 = scmp.eq.s32.totalorder %s9, 0
      %p43 = por %p41, %p42
      %p44 = scmp.ne.s32.totalorder %s33, %s36
      %p45 = scmp.eq.s32.totalorder %s14, 3
      %p46 = por %p44, %p45
      %p47 = scmp.ne.s32.totalorder %s36, %s37
      %p48 = scmp.eq.s32.totalorder %s14, 0
      %p49 = por %p47, %p48
      %p50 = scmp.ne.s32.totalorder %s36, %s37
      %p51 = scmp.eq.s32.totalorder %s15, 3
      %p52 = por %p50, %p51
      %p54 = scmp.ne.s32.totalorder %s37, %s53
      %p55 = scmp.eq.s32.totalorder %s15, 0
      %p56 = por %p54, %p55
      %s58 = sadd.s32 %s57, 1
      %p61 = scmp.eq.s32.totalorder %s9, 3
      %p62 = scmp.ne.s32.totalorder %s57, %s59
      %p63 = scmp.eq.s32.totalorder %s9, 0
      %p64 = por %p62, %p63
      %p65 = scmp.ne.s32.totalorder %s57, %s59
      %p66 = scmp.eq.s32.totalorder %s14, 3
      %p67 = por %p65, %p66
      %p68 = scmp.ne.s32.totalorder %s59, %s60
      %p69 = scmp.eq.s32.totalorder %s14, 0
      %p70 = por %p68, %p69
      %p71 = scmp.ne.s32.totalorder %s59, %s60
      %p72 = scmp.eq.s32.totalorder %s15, 3
      %p73 = por %p71, %p72
      %p75 = scmp.ne.s32.totalorder %s60, %s74
      %p76 = scmp.eq.s32.totalorder %s15, 0
      %p77 = por %p75, %p76
      %s79 = sadd.s32 %s78, 1
      %p82 = scmp.eq.s32.totalorder %s9, 3
      %p83 = scmp.ne.s32.totalorder %s78, %s80
      %p84 = scmp.eq.s32.totalorder %s9, 0
      %p85 = por %p83, %p84
      %p86 = scmp.ne.s32.totalorder %s78, %s80
      %p87 = scmp.eq.s32.totalorder %s14, 3
      %p88 = por %p86, %p87
      %p89 = scmp.ne.s32.totalorder %s80, %s81
      %p90 = scmp.eq.s32.totalorder %s14, 0
      %p91 = por %p89, %p90
      %p92 = scmp.ne.s32.totalorder %s80, %s81
      %p93 = scmp.eq.s32.totalorder %s15, 3
      %p94 = por %p92, %p93
      %p96 = scmp.ne.s32.totalorder %s81, %s95
      %p97 = scmp.eq.s32.totalorder %s15, 0
      %p98 = por %p96, %p97
      %s99 = ssub.s32 %s16, %s28
      %p100 = scmp.eq.s32.totalorder %s99, 0
      %s102 = sadd.s32 %s101, 1
      %s103 = scalar_select %p100, %s101, %s102
      %p106 = pneg %p100
      %p107 = scmp.eq.s32.totalorder %s9, 3
      %p108 = por %p106, %p107
      %p109 = scmp.ne.s32.totalorder %s101, %s104
      %p110 = scmp.eq.s32.totalorder %s9, 0
      %p111 = por %p109, %p110
      %p112 = scmp.ne.s32.totalorder %s101, %s104
      %p113 = scmp.eq.s32.totalorder %s14, 3
      %p114 = por %p112, %p113
      %p115 = scmp.ne.s32.totalorder %s104, %s105
      %p116 = scmp.eq.s32.totalorder %s14, 0
      %p117 = por %p115, %p116
      %p118 = scmp.ne.s32.totalorder %s104, %s105
      %p119 = scmp.eq.s32.totalorder %s15, 3
      %p120 = por %p118, %p119
      %p122 = scmp.ne.s32.totalorder %s105, %s121
      %p123 = scmp.eq.s32.totalorder %s15, 0
      %p124 = por %p122, %p123
      %p125 = scmp.le.s32.totalorder 1, %s9
      %p126 = scmp.lt.s32.totalorder %s9, 5
      %p127 = pnand %p125, %p126
      %p128 = pneg %p127
      // Predicated region
      $region9: #{seal_gcn_forward.8} parent=5 // pred_check
        _
      $region10: #{seal_gcn_forward.8} parent=5 // pred_check_branch
        %130 = sbr.rel (%p127) target = $region12
      $region11: #{seal_gcn_forward.8} parent=5 // pred_region
        %s131 = ssub.s32 %s9, 1
        // Predicated region
        $region13: #{seal_gcn_forward.8} parent=11 // pred_check
          %p132 = pneg %p70
        $region14: #{seal_gcn_forward.8} parent=11 // pred_check_branch
          %134 = sbr.rel (%p132) target = $region16
        $region15: #{seal_gcn_forward.8} parent=11 // pred_region
          _
        $region16: #{seal_gcn_forward.8} parent=11 // pred_fallthru
          _
        // Predicated region
        $region17: #{seal_gcn_forward.8} parent=11 // pred_check
          %p135 = pneg %p91
        $region18: #{seal_gcn_forward.8} parent=11 // pred_check_branch
          %137 = sbr.rel (%p135) target = $region20
        $region19: #{seal_gcn_forward.8} parent=11 // pred_region
          _
        $region20: #{seal_gcn_forward.8} parent=11 // pred_fallthru
          _
      $region12: #{seal_gcn_forward.8} parent=5 // pred_fallthru
        _
      %p138 = scmp.lt.s32.totalorder %s9, 4
      // Predicated region
      $region21: #{seal_gcn_forward.8} parent=5 // pred_check
        %p139 = pneg %p138
      $region22: #{seal_gcn_forward.8} parent=5 // pred_check_branch
        %141 = sbr.rel (%p139) target = $region24
      $region23: #{seal_gcn_forward.8} parent=5 // pred_region
        // Predicated region
        $region25: #{seal_gcn_forward.8} parent=23 // pred_check
          %p142 = pneg %p43
        $region26: #{seal_gcn_forward.8} parent=23 // pred_check_branch
          %144 = sbr.rel (%p142) target = $region28
        $region27: #{seal_gcn_forward.8} parent=23 // pred_region
          %s145 = sand.u32 %s33, 1
          %s146 = sand.u32 %s33, 1
          %s147 = smul.addr %s146, 64
          %s148 = scalar_lea.vmem [#allocation3], %s147
          %s149 = smul.u32 16, %s16
          %s150 = smul.addr %s149, 2
          %s151 = sadd.s32 %s17, %s150
          %s152 = smul.addr %s151, 4
          %s153 = scalar_lea.vmem %s0, %s152
          // Predicated region
          $region29: #{seal_gcn_forward.8} parent=27 // pred_check
            _
          $region30: #{seal_gcn_forward.8} parent=27 // pred_check_branch
            %155 = sbr.rel (0) target = $region32
          $region31: #{seal_gcn_forward.8} parent=27 // pred_region
            // Predicated region
            $region33: #{seal_gcn_forward.8} parent=31 // pred_check
              _
            $region34: #{seal_gcn_forward.8} parent=31 // pred_check_branch
              %157 = sbr.rel target = $region36
            $region35: #{seal_gcn_forward.8} parent=31 // pred_region
              // Predicated region
              $region48: #{seal_gcn_forward.8} parent=35 // pred_check
                _
              $region49: #{seal_gcn_forward.8} parent=35 // pred_check_branch
                %202 = sbr.rel (0) target = $region51
              $region50: #{seal_gcn_forward.8} parent=35 // pred_region
                loop: start=0, step=1, limit=1
                $region52: #{seal_gcn_forward.8} parent=50 // loop_pre_header
                  _
                $region53: #{seal_gcn_forward.8} parent=50 // loop_header
                  %s204 = sphi 0, %s208
                  %p205 = scmp.ge.s32.totalorder %s204, 1
                  %s209 = sphi %s153, %s153
                  %s210 = sphi %s148, %s148
                $region54: #{seal_gcn_forward.8} parent=50 // loop_header_branch
                  %207 = sbr.rel (%p205) target = $region58
                $region55: #{seal_gcn_forward.8} parent=50 // loop_body
                  _
                $region56: #{seal_gcn_forward.8} parent=50 // loop_footer
                  %s208 = sadd.s32 1, %s204
                $region57: #{seal_gcn_forward.8} parent=50 // loop_footer_branch
                  %203 = sbr.rel target = $region53
                $region58: #{seal_gcn_forward.8} parent=50 // loop_exit
                  _
                loop: start=0, step=1, limit=1
                $region59: #{seal_gcn_forward.8} parent=50 // loop_pre_header
                  _
                $region60: #{seal_gcn_forward.8} parent=50 // loop_header
                  %s213 = sphi 0, %s217
                  %p214 = scmp.ge.s32.totalorder %s213, 1
                  %s218 = sphi %s153, %s153
                  %s219 = sphi %s148, %s148
                $region61: #{seal_gcn_forward.8} parent=50 // loop_header_branch
                  %216 = sbr.rel (%p214) target = $region65
                $region62: #{seal_gcn_forward.8} parent=50 // loop_body
                  %v220 = vld [vmem:[%s218] sm:$0xf]
                  %221 = vst [vmem:[%s219] sm:$0xf] %v220
                  %v222 = vld [vmem:[%s218 + $0x8] sm:$0xf]
                  %223 = vst [vmem:[%s219 + $0x4] sm:$0xf] %v222
                  %v224 = vld [vmem:[%s218 + $0x10] sm:$0xf]
                  %225 = vst [vmem:[%s219 + $0x8] sm:$0xf] %v224
                  %v226 = vld [vmem:[%s218 + $0x18] sm:$0xf]
                  %227 = vst [vmem:[%s219 + $0xc] sm:$0xf] %v226
                  %v228 = vld [vmem:[%s218 + $0x20] sm:$0xf]
                  %229 = vst [vmem:[%s219 + $0x10] sm:$0xf] %v228
                  %v230 = vld [vmem:[%s218 + $0x28] sm:$0xf]
                  %231 = vst [vmem:[%s219 + $0x14] sm:$0xf] %v230
                  %v232 = vld [vmem:[%s218 + $0x30] sm:$0xf]
                  %233 = vst [vmem:[%s219 + $0x18] sm:$0xf] %v232
                  %v234 = vld [vmem:[%s218 + $0x38] sm:$0xf]
                  %235 = vst [vmem:[%s219 + $0x1c] sm:$0xf] %v234
                  %v236 = vld [vmem:[%s218 + $0x40] sm:$0xf]
                  %237 = vst [vmem:[%s219 + $0x20] sm:$0xf] %v236
                  %v238 = vld [vmem:[%s218 + $0x48] sm:$0xf]
                  %239 = vst [vmem:[%s219 + $0x24] sm:$0xf] %v238
                  %v240 = vld [vmem:[%s218 + $0x50] sm:$0xf]
                  %241 = vst [vmem:[%s219 + $0x28] sm:$0xf] %v240
                  %v242 = vld [vmem:[%s218 + $0x58] sm:$0xf]
                  %243 = vst [vmem:[%s219 + $0x2c] sm:$0xf] %v242
                  %v244 = vld [vmem:[%s218 + $0x60] sm:$0xf]
                  %245 = vst [vmem:[%s219 + $0x30] sm:$0xf] %v244
                  %v246 = vld [vmem:[%s218 + $0x68] sm:$0xf]
                  %247 = vst [vmem:[%s219 + $0x34] sm:$0xf] %v246
                  %v248 = vld [vmem:[%s218 + $0x70] sm:$0xf]
                  %249 = vst [vmem:[%s219 + $0x38] sm:$0xf] %v248
                  %v250 = vld [vmem:[%s218 + $0x78] sm:$0xf]
                  %251 = vst [vmem:[%s219 + $0x3c] sm:$0xf] %v250
                $region63: #{seal_gcn_forward.8} parent=50 // loop_footer
                  %s217 = sadd.s32 1, %s213
                $region64: #{seal_gcn_forward.8} parent=50 // loop_footer_branch
                  %212 = sbr.rel target = $region60
                $region65: #{seal_gcn_forward.8} parent=50 // loop_exit
                  _
              $region51: #{seal_gcn_forward.8} parent=35 // pred_fallthru
                _
            $region36: #{seal_gcn_forward.8} parent=31 // pred_fallthru
              _
            // Predicated region
            $region37: #{seal_gcn_forward.8} parent=31 // pred_check
              _
            $region38: #{seal_gcn_forward.8} parent=31 // pred_check_branch
              %159 = sbr.rel (0) target = $region40
            $region39: #{seal_gcn_forward.8} parent=31 // pred_region
              loop: start=0, step=1, limit=1
              $region41: #{seal_gcn_forward.8} parent=39 // loop_pre_header
                _
              $region42: #{seal_gcn_forward.8} parent=39 // loop_header
                %s162 = sphi 0, %s166
                %p163 = scmp.ge.s32.totalorder %s162, 1
                %s167 = sphi %s153, %s153
                %s168 = sphi %s148, %s148
              $region43: #{seal_gcn_forward.8} parent=39 // loop_header_branch
                %165 = sbr.rel (%p163) target = $region47
              $region44: #{seal_gcn_forward.8} parent=39 // loop_body
                %v169 = vld [vmem:[%s167] sm:$0xf]
                %170 = vst [vmem:[%s168] sm:$0xf] %v169
                %v171 = vld [vmem:[%s167 + $0x8] sm:$0xf]
                %172 = vst [vmem:[%s168 + $0x4] sm:$0xf] %v171
                %v173 = vld [vmem:[%s167 + $0x10] sm:$0xf]
                %174 = vst [vmem:[%s168 + $0x8] sm:$0xf] %v173
                %v175 = vld [vmem:[%s167 + $0x18] sm:$0xf]
                %176 = vst [vmem:[%s168 + $0xc] sm:$0xf] %v175
                %v177 = vld [vmem:[%s167 + $0x20] sm:$0xf]
                %178 = vst [vmem:[%s168 + $0x10] sm:$0xf] %v177
                %v179 = vld [vmem:[%s167 + $0x28] sm:$0xf]
                %180 = vst [vmem:[%s168 + $0x14] sm:$0xf] %v179
                %v181 = vld [vmem:[%s167 + $0x30] sm:$0xf]
                %182 = vst [vmem:[%s168 + $0x18] sm:$0xf] %v181
                %v183 = vld [vmem:[%s167 + $0x38] sm:$0xf]
                %184 = vst [vmem:[%s168 + $0x1c] sm:$0xf] %v183
                %v185 = vld [vmem:[%s167 + $0x40] sm:$0xf]
                %186 = vst [vmem:[%s168 + $0x20] sm:$0xf] %v185
                %v187 = vld [vmem:[%s167 + $0x48] sm:$0xf]
                %188 = vst [vmem:[%s168 + $0x24] sm:$0xf] %v187
                %v189 = vld [vmem:[%s167 + $0x50] sm:$0xf]
                %190 = vst [vmem:[%s168 + $0x28] sm:$0xf] %v189
                %v191 = vld [vmem:[%s167 + $0x58] sm:$0xf]
                %192 = vst [vmem:[%s168 + $0x2c] sm:$0xf] %v191
                %v193 = vld [vmem:[%s167 + $0x60] sm:$0xf]
                %194 = vst [vmem:[%s168 + $0x30] sm:$0xf] %v193
                %v195 = vld [vmem:[%s167 + $0x68] sm:$0xf]
                %196 = vst [vmem:[%s168 + $0x34] sm:$0xf] %v195
                %v197 = vld [vmem:[%s167 + $0x70] sm:$0xf]
                %198 = vst [vmem:[%s168 + $0x38] sm:$0xf] %v197
                %v199 = vld [vmem:[%s167 + $0x78] sm:$0xf]
                %200 = vst [vmem:[%s168 + $0x3c] sm:$0xf] %v199
              $region45: #{seal_gcn_forward.8} parent=39 // loop_footer
                %s166 = sadd.s32 1, %s162
              $region46: #{seal_gcn_forward.8} parent=39 // loop_footer_branch
                %161 = sbr.rel target = $region42
              $region47: #{seal_gcn_forward.8} parent=39 // loop_exit
                _
            $region40: #{seal_gcn_forward.8} parent=31 // pred_fallthru
              _
          $region32: #{seal_gcn_forward.8} parent=27 // pred_fallthru
            _
          %252 = vnop
        $region28: #{seal_gcn_forward.8} parent=23 // pred_fallthru
          _
      $region24: #{seal_gcn_forward.8} parent=5 // pred_fallthru
        _
      %p253 = scmp.le.s32.totalorder 1, %s9
      %p254 = scmp.lt.s32.totalorder %s9, 5
      %p255 = pnand %p253, %p254
      %p256 = pneg %p255
      // Predicated region
      $region66: #{seal_gcn_forward.8} parent=5 // pred_check
        _
      $region67: #{seal_gcn_forward.8} parent=5 // pred_check_branch
        %258 = sbr.rel (%p255) target = $region69
      $region68: #{seal_gcn_forward.8} parent=5 // pred_region
        %s259 = ssub.s32 %s9, 1
        %s260 = sand.u32 %s36, 1
        %s261 = sand.u32 %s36, 1
        %s262 = smul.addr %s261, 64
        %s263 = scalar_lea.vmem [#allocation3], %s262
        // Predicated region
        $region70: #{seal_gcn_forward.8} parent=68 // pred_check
          %p264 = pneg %p49
        $region71: #{seal_gcn_forward.8} parent=68 // pred_check_branch
          %266 = sbr.rel (%p264) target = $region73
        $region72: #{seal_gcn_forward.8} parent=68 // pred_region
          _
        $region73: #{seal_gcn_forward.8} parent=68 // pred_fallthru
          _
        %s267 = sand.u32 %s36, 1
        %s268 = sand.u32 %s36, 1
        %s269 = smul.addr %s268, 64
        %s270 = scalar_lea.vmem [#allocation3], %s269
        %p271 = pneg %p49
        %p272 = pneg %p46
        %p273 = pneg %p70
        %p274 = pneg %p67
        %p275 = pneg %p91
        %p276 = pneg %p88
        %p277 = pneg %p117
        %p278 = pneg %p114
        %s279 = smul.u32 16, %s18
        %p280 = scmp.lt.s32.totalorder %s279, 31
        %s281 = scalar_select %p280, %s279, 31
        %s282 = smul.addr %s281, 4
        %s283 = scalar_lea.vmem %s3, %s282
        %s284 = smul.u32 16, %s18
        %s285 = smul.u32 16, %s18
        %p286 = scmp.lt.s32.totalorder %s285, 31
        %s287 = scalar_select %p286, %s285, 31
        %s288 = smul.addr %s287, 4
        %s289 = scalar_lea.vmem %s3, %s288
        %s290 = smul.u32 16, %s18
        %p292 = scmp.eq.s32.totalorder %s19, 0
        // Predicated region
        $region74: #{seal_gcn_forward.8} parent=68 // pred_check
          %p293 = pneg %p292
        $region75: #{seal_gcn_forward.8} parent=68 // pred_check_branch
          %295 = sbr.rel (%p293) target = $region77
        $region76: #{seal_gcn_forward.8} parent=68 // pred_region
          %296 = vst [vmem:[#allocation2] sm:$0xff] 0.0
          %297 = vst [vmem:[#allocation2 + $0x8] sm:$0xff] 0.0
          %298 = vst [vmem:[#allocation2 + $0x10] sm:$0xff] 0.0
          %299 = vst [vmem:[#allocation2 + $0x18] sm:$0xff] 0.0
          %300 = vst [vmem:[#allocation2 + $0x20] sm:$0xff] 0.0
          %301 = vst [vmem:[#allocation2 + $0x28] sm:$0xff] 0.0
          %302 = vst [vmem:[#allocation2 + $0x30] sm:$0xff] 0.0
          %303 = vst [vmem:[#allocation2 + $0x38] sm:$0xff] 0.0
          %304 = vst [vmem:[#allocation2 + $0x40] sm:$0xff] 0.0
          %305 = vst [vmem:[#allocation2 + $0x48] sm:$0xff] 0.0
          %306 = vst [vmem:[#allocation2 + $0x50] sm:$0xff] 0.0
          %307 = vst [vmem:[#allocation2 + $0x58] sm:$0xff] 0.0
          %308 = vst [vmem:[#allocation2 + $0x60] sm:$0xff] 0.0
          %309 = vst [vmem:[#allocation2 + $0x68] sm:$0xff] 0.0
          %310 = vst [vmem:[#allocation2 + $0x70] sm:$0xff] 0.0
          %311 = vst [vmem:[#allocation2 + $0x78] sm:$0xff] 0.0
        $region77: #{seal_gcn_forward.8} parent=68 // pred_fallthru
          _
        %s312 = smul.u32 %s19, 128
        %v313 = vld [vmem:[#allocation2] sm:$0xff]
        %v314 = vld [vmem:[#allocation2 + $0x8] sm:$0xff]
        %v315 = vld [vmem:[#allocation2 + $0x10] sm:$0xff]
        %v316 = vld [vmem:[#allocation2 + $0x18] sm:$0xff]
        %v317 = vld [vmem:[#allocation2 + $0x20] sm:$0xff]
        %v318 = vld [vmem:[#allocation2 + $0x28] sm:$0xff]
        %v319 = vld [vmem:[#allocation2 + $0x30] sm:$0xff]
        %v320 = vld [vmem:[#allocation2 + $0x38] sm:$0xff]
        %v321 = vld [vmem:[#allocation2 + $0x40] sm:$0xff]
        %v322 = vld [vmem:[#allocation2 + $0x48] sm:$0xff]
        %v323 = vld [vmem:[#allocation2 + $0x50] sm:$0xff]
        %v324 = vld [vmem:[#allocation2 + $0x58] sm:$0xff]
        %v325 = vld [vmem:[#allocation2 + $0x60] sm:$0xff]
        %v326 = vld [vmem:[#allocation2 + $0x68] sm:$0xff]
        %v327 = vld [vmem:[#allocation2 + $0x70] sm:$0xff]
        %v328 = vld [vmem:[#allocation2 + $0x78] sm:$0xff]
        %v329 = vld [vmem:[%s263] sm:$0xf]
        %v330 = vld [vmem:[%s263 + $0x4] sm:$0xf]
        %v331 = vld [vmem:[%s263 + $0x8] sm:$0xf]
        %v332 = vld [vmem:[%s263 + $0xc] sm:$0xf]
        %v333 = vld [vmem:[%s263 + $0x10] sm:$0xf]
        %v334 = vld [vmem:[%s263 + $0x14] sm:$0xf]
        %v335 = vld [vmem:[%s263 + $0x18] sm:$0xf]
        %v336 = vld [vmem:[%s263 + $0x1c] sm:$0xf]
        %v337 = vld [vmem:[%s263 + $0x20] sm:$0xf]
        %v338 = vld [vmem:[%s263 + $0x24] sm:$0xf]
        %v339 = vld [vmem:[%s263 + $0x28] sm:$0xf]
        %v340 = vld [vmem:[%s263 + $0x2c] sm:$0xf]
        %v341 = vld [vmem:[%s263 + $0x30] sm:$0xf]
        %v342 = vld [vmem:[%s263 + $0x34] sm:$0xf]
        %v343 = vld [vmem:[%s263 + $0x38] sm:$0xf]
        %v344 = vld [vmem:[%s263 + $0x3c] sm:$0xf]
        %s345 = sshra.s32 %s312, 3
        %s346 = sand.u32 %s312, 7
        %s347 = smul.addr %s345, 4
        %s348 = scalar_lea.vmem %s1, %s347
        %v349 = vld [vmem:[%s348] sm:$0xf]
        %v350 = vld [vmem:[%s348 + $0x4] sm:$0xf]
        %v351 = vld [vmem:[%s348 + $0x8] sm:$0xf]
        %v352 = vld [vmem:[%s348 + $0xc] sm:$0xf]
        %v353 = vld [vmem:[%s348 + $0x10] sm:$0xf]
        %v354 = vld [vmem:[%s348 + $0x14] sm:$0xf]
        %v355 = vld [vmem:[%s348 + $0x18] sm:$0xf]
        %v356 = vld [vmem:[%s348 + $0x1c] sm:$0xf]
        %v357 = vld [vmem:[%s348 + $0x20] sm:$0xf]
        %v358 = vld [vmem:[%s348 + $0x24] sm:$0xf]
        %v359 = vld [vmem:[%s348 + $0x28] sm:$0xf]
        %v360 = vld [vmem:[%s348 + $0x2c] sm:$0xf]
        %v361 = vld [vmem:[%s348 + $0x30] sm:$0xf]
        %v362 = vld [vmem:[%s348 + $0x34] sm:$0xf]
        %v363 = vld [vmem:[%s348 + $0x38] sm:$0xf]
        %v364 = vld [vmem:[%s348 + $0x3c] sm:$0xf]
        %v381 = vunpack.c.l.b16 %v329
        %v382 = vunpack.c.l.b16 %v330
        %v383 = vunpack.c.l.b16 %v331
        %v384 = vunpack.c.l.b16 %v332
        %v385 = vunpack.c.l.b16 %v333
        %v386 = vunpack.c.l.b16 %v334
        %v387 = vunpack.c.l.b16 %v335
        %v388 = vunpack.c.l.b16 %v336
        %v389 = vunpack.c.l.b16 %v337
        %v390 = vunpack.c.l.b16 %v338
        %v391 = vunpack.c.l.b16 %v339
        %v392 = vunpack.c.l.b16 %v340
        %v393 = vunpack.c.l.b16 %v341
        %v394 = vunpack.c.l.b16 %v342
        %v395 = vunpack.c.l.b16 %v343
        %v396 = vunpack.c.l.b16 %v344
        %v397 = vpack.c.b16 %v382, %v381
        %v398 = vpack.c.b16 %v384, %v383
        %v399 = vpack.c.b16 %v386, %v385
        %v400 = vpack.c.b16 %v388, %v387
        %v401 = vpack.c.b16 %v390, %v389
        %v402 = vpack.c.b16 %v392, %v391
        %v403 = vpack.c.b16 %v394, %v393
        %v404 = vpack.c.b16 %v396, %v395
        %v429 = vunpack.c.l.b16 %v349
        %v430 = vunpack.c.l.b16 %v350
        %v431 = vunpack.c.l.b16 %v351
        %v432 = vunpack.c.l.b16 %v352
        %v433 = vunpack.c.l.b16 %v353
        %v434 = vunpack.c.l.b16 %v354
        %v435 = vunpack.c.l.b16 %v355
        %v436 = vunpack.c.l.b16 %v356
        %v437 = vunpack.c.l.b16 %v357
        %v438 = vunpack.c.l.b16 %v358
        %v439 = vunpack.c.l.b16 %v359
        %v440 = vunpack.c.l.b16 %v360
        %v441 = vunpack.c.l.b16 %v361
        %v442 = vunpack.c.l.b16 %v362
        %v443 = vunpack.c.l.b16 %v363
        %v444 = vunpack.c.l.b16 %v364
        %v445 = vpack.c.b16 %v430, %v429
        %v446 = vpack.c.b16 %v432, %v431
        %v447 = vpack.c.b16 %v434, %v433
        %v448 = vpack.c.b16 %v436, %v435
        %v449 = vpack.c.b16 %v438, %v437
        %v450 = vpack.c.b16 %v440, %v439
        %v451 = vpack.c.b16 %v442, %v441
        %v452 = vpack.c.b16 %v444, %v443
        %461 = vmatprep.subr.bf16.mxu0 0
        %462 = vmatpush1.bf16.msra.mxu0 %v445
        %463 = vmatprep.subr.bf16.mxu0 0
        %464 = vmatpush1.bf16.msra.mxu0 %v446
        %465 = vmatprep.subr.bf16.mxu0 0
        %466 = vmatpush1.bf16.msra.mxu0 %v447
        %467 = vmatprep.subr.bf16.mxu0 0
        %468 = vmatpush1.bf16.msra.mxu0 %v448
        %469 = vmatprep.subr.bf16.mxu0 0
        %470 = vmatpush1.bf16.msra.mxu0 %v449
        %471 = vmatprep.subr.bf16.mxu0 0
        %472 = vmatpush1.bf16.msra.mxu0 %v450
        %473 = vmatprep.subr.bf16.mxu0 0
        %474 = vmatpush1.bf16.msra.mxu0 %v451
        %475 = vmatprep.subr.bf16.mxu0 0
        %476 = vmatpush1.bf16.msra.mxu0 %v452
        %477 = vmatprep.subr.bf16.mxu0 0
        %478 = vmatpush1.bf16.msra.mxu0 0
        %479 = vmatprep.subr.bf16.mxu0 0
        %480 = vmatpush1.bf16.msra.mxu0 0
        %481 = vmatprep.subr.bf16.mxu0 0
        %482 = vmatpush1.bf16.msra.mxu0 0
        %483 = vmatprep.subr.bf16.mxu0 0
        %484 = vmatpush1.bf16.msra.mxu0 0
        %485 = vmatprep.subr.bf16.mxu0 0
        %486 = vmatpush1.bf16.msra.mxu0 0
        %487 = vmatprep.subr.bf16.mxu0 0
        %488 = vmatpush1.bf16.msra.mxu0 0
        %489 = vmatprep.subr.bf16.mxu0 0
        %490 = vmatpush1.bf16.msra.mxu0 0
        %491 = vmatprep.subr.bf16.mxu0 0
        %492 = vmatpush1.bf16.msra.mxu0 0
        %493 = vmatprep.mubr.bf16.mxu0 0
        %494 = vmatmul.mubr.bf16.gmra.mrb[0].mxu0 %v397
        %v495 = vpop.f32.mrb[0].mxu0
        %v496 = vadd.f32 0.0, %v495
        %v497 = vpop.f32.mrb[0].mxu0
        %v498 = vpop.f32.mrb[0].mxu0
        %v499 = vadd.f32 0.0, %v498
        %v500 = vpop.f32.mrb[0].mxu0
        %501 = vmatprep.mubr.bf16.mxu0 0
        %502 = vmatmul.mubr.bf16.gmra.mrb[0].mxu0 %v398
        %v503 = vpop.f32.mrb[0].mxu0
        %v504 = vadd.f32 0.0, %v503
        %v505 = vpop.f32.mrb[0].mxu0
        %v506 = vpop.f32.mrb[0].mxu0
        %v507 = vadd.f32 0.0, %v506
        %v508 = vpop.f32.mrb[0].mxu0
        %509 = vmatprep.mubr.bf16.mxu0 0
        %510 = vmatmul.mubr.bf16.gmra.mrb[0].mxu0 %v399
        %v511 = vpop.f32.mrb[0].mxu0
        %v512 = vadd.f32 0.0, %v511
        %v513 = vpop.f32.mrb[0].mxu0
        %v514 = vpop.f32.mrb[0].mxu0
        %v515 = vadd.f32 0.0, %v514
        %v516 = vpop.f32.mrb[0].mxu0
        %517 = vmatprep.mubr.bf16.mxu0 0
        %518 = vmatmul.mubr.bf16.gmra.mrb[0].mxu0 %v400
        %v519 = vpop.f32.mrb[0].mxu0
        %v520 = vadd.f32 0.0, %v519
        %v521 = vpop.f32.mrb[0].mxu0
        %v522 = vpop.f32.mrb[0].mxu0
        %v523 = vadd.f32 0.0, %v522
        %v524 = vpop.f32.mrb[0].mxu0
        %525 = vmatprep.mubr.bf16.mxu0 0
        %526 = vmatmul.mubr.bf16.gmra.mrb[0].mxu0 %v401
        %v527 = vpop.f32.mrb[0].mxu0
        %v528 = vadd.f32 0.0, %v527
        %v529 = vpop.f32.mrb[0].mxu0
        %v530 = vpop.f32.mrb[0].mxu0
        %v531 = vadd.f32 0.0, %v530
        %v532 = vpop.f32.mrb[0].mxu0
        %533 = vmatprep.mubr.bf16.mxu0 0
        %534 = vmatmul.mubr.bf16.gmra.mrb[0].mxu0 %v402
        %v535 = vpop.f32.mrb[0].mxu0
        %v536 = vadd.f32 0.0, %v535
        %v537 = vpop.f32.mrb[0].mxu0
        %v538 = vpop.f32.mrb[0].mxu0
        %v539 = vadd.f32 0.0, %v538
        %v540 = vpop.f32.mrb[0].mxu0
        %541 = vmatprep.mubr.bf16.mxu0 0
        %542 = vmatmul.mubr.bf16.gmra.mrb[0].mxu0 %v403
        %v543 = vpop.f32.mrb[0].mxu0
        %v544 = vadd.f32 0.0, %v543
        %v545 = vpop.f32.mrb[0].mxu0
        %v546 = vpop.f32.mrb[0].mxu0
        %v547 = vadd.f32 0.0, %v546
        %v548 = vpop.f32.mrb[0].mxu0
        %549 = vmatprep.mubr.bf16.mxu0 0
        %550 = vmatmul.mubr.bf16.gmra.mrb[0].mxu0 %v404
        %v551 = vpop.f32.mrb[0].mxu0
        %v552 = vadd.f32 0.0, %v551
        %v553 = vpop.f32.mrb[0].mxu0
        %v554 = vpop.f32.mrb[0].mxu0
        %v555 = vadd.f32 0.0, %v554
        %v556 = vpop.f32.mrb[0].mxu0
        %557 = vdwg.mxu0
        %v558 = vadd.f32 %v313, %v496
        %v559 = vadd.f32 %v314, %v499
        %v560 = vadd.f32 %v315, %v504
        %v561 = vadd.f32 %v316, %v507
        %v562 = vadd.f32 %v317, %v512
        %v563 = vadd.f32 %v318, %v515
        %v564 = vadd.f32 %v319, %v520
        %v565 = vadd.f32 %v320, %v523
        %v566 = vadd.f32 %v321, %v528
        %v567 = vadd.f32 %v322, %v531
        %v568 = vadd.f32 %v323, %v536
        %v569 = vadd.f32 %v324, %v539
        %v570 = vadd.f32 %v325, %v544
        %v571 = vadd.f32 %v326, %v547
        %v572 = vadd.f32 %v327, %v552
        %v573 = vadd.f32 %v328, %v555
        %574 = vst [vmem:[#allocation2] sm:$0xff] %v558
        %575 = vst [vmem:[#allocation2 + $0x8] sm:$0xff] %v559
        %576 = vst [vmem:[#allocation2 + $0x10] sm:$0xff] %v560
        %577 = vst [vmem:[#allocation2 + $0x18] sm:$0xff] %v561
        %578 = vst [vmem:[#allocation2 + $0x20] sm:$0xff] %v562
        %579 = vst [vmem:[#allocation2 + $0x28] sm:$0xff] %v563
        %580 = vst [vmem:[#allocation2 + $0x30] sm:$0xff] %v564
        %581 = vst [vmem:[#allocation2 + $0x38] sm:$0xff] %v565
        %582 = vst [vmem:[#allocation2 + $0x40] sm:$0xff] %v566
        %583 = vst [vmem:[#allocation2 + $0x48] sm:$0xff] %v567
        %584 = vst [vmem:[#allocation2 + $0x50] sm:$0xff] %v568
        %585 = vst [vmem:[#allocation2 + $0x58] sm:$0xff] %v569
        %586 = vst [vmem:[#allocation2 + $0x60] sm:$0xff] %v570
        %587 = vst [vmem:[#allocation2 + $0x68] sm:$0xff] %v571
        %588 = vst [vmem:[#allocation2 + $0x70] sm:$0xff] %v572
        %589 = vst [vmem:[#allocation2 + $0x78] sm:$0xff] %v573
        %p590 = scmp.eq.s32.totalorder %s19, 1
        // Predicated region
        $region78: #{seal_gcn_forward.8} parent=68 // pred_check
          %p591 = pneg %p590
        $region79: #{seal_gcn_forward.8} parent=68 // pred_check_branch
          %593 = sbr.rel (%p591) target = $region81
        $region80: #{seal_gcn_forward.8} parent=68 // pred_region
          %v594 = vld [vmem:[#allocation2] sm:$0xff]
          %v595 = vld [vmem:[#allocation2 + $0x8] sm:$0xff]
          %v596 = vld [vmem:[#allocation2 + $0x10] sm:$0xff]
          %v597 = vld [vmem:[#allocation2 + $0x18] sm:$0xff]
          %v598 = vld [vmem:[#allocation2 + $0x20] sm:$0xff]
          %v599 = vld [vmem:[#allocation2 + $0x28] sm:$0xff]
          %v600 = vld [vmem:[#allocation2 + $0x30] sm:$0xff]
          %v601 = vld [vmem:[#allocation2 + $0x38] sm:$0xff]
          %v602 = vld [vmem:[#allocation2 + $0x40] sm:$0xff]
          %v603 = vld [vmem:[#allocation2 + $0x48] sm:$0xff]
          %v604 = vld [vmem:[#allocation2 + $0x50] sm:$0xff]
          %v605 = vld [vmem:[#allocation2 + $0x58] sm:$0xff]
          %v606 = vld [vmem:[#allocation2 + $0x60] sm:$0xff]
          %v607 = vld [vmem:[#allocation2 + $0x68] sm:$0xff]
          %v608 = vld [vmem:[#allocation2 + $0x70] sm:$0xff]
          %v609 = vld [vmem:[#allocation2 + $0x78] sm:$0xff]
          %v610 = vld [vmem:[%s2] sm:$0x1]
          %v612 = vlaneseq
          %v613 = vshrl.u32 %v612, 7
          %v614 = vsub.s32 0, %v613
          %v615 = vrot.slane %v610, %v614
          %v617 = vadd.f32 %v594, %v615
          %v618 = vadd.f32 %v595, %v615
          %v619 = vadd.f32 %v596, %v615
          %v620 = vadd.f32 %v597, %v615
          %v621 = vadd.f32 %v598, %v615
          %v622 = vadd.f32 %v599, %v615
          %v623 = vadd.f32 %v600, %v615
          %v624 = vadd.f32 %v601, %v615
          %v625 = vadd.f32 %v602, %v615
          %v626 = vadd.f32 %v603, %v615
          %v627 = vadd.f32 %v604, %v615
          %v628 = vadd.f32 %v605, %v615
          %v629 = vadd.f32 %v606, %v615
          %v630 = vadd.f32 %v607, %v615
          %v631 = vadd.f32 %v608, %v615
          %v632 = vadd.f32 %v609, %v615
          %v633 = vpack.c.bf16 %v618, %v617
          %v634 = vpack.c.bf16 %v620, %v619
          %v635 = vpack.c.bf16 %v622, %v621
          %v636 = vpack.c.bf16 %v624, %v623
          %v637 = vpack.c.bf16 %v626, %v625
          %v638 = vpack.c.bf16 %v628, %v627
          %v639 = vpack.c.bf16 %v630, %v629
          %v640 = vpack.c.bf16 %v632, %v631
          %v649 = vunpack.c.l.b16 %v633
          %v650 = vunpack.c.h.b16 %v633
          %v651 = vunpack.c.l.b16 %v634
          %v652 = vunpack.c.h.b16 %v634
          %v653 = vunpack.c.l.b16 %v635
          %v654 = vunpack.c.h.b16 %v635
          %v655 = vunpack.c.l.b16 %v636
          %v656 = vunpack.c.h.b16 %v636
          %v657 = vunpack.c.l.b16 %v637
          %v658 = vunpack.c.h.b16 %v637
          %v659 = vunpack.c.l.b16 %v638
          %v660 = vunpack.c.h.b16 %v638
          %v661 = vunpack.c.l.b16 %v639
          %v662 = vunpack.c.h.b16 %v639
          %v663 = vunpack.c.l.b16 %v640
          %v664 = vunpack.c.h.b16 %v640
          %v665 = vpack.c.b16 %v649, %v649
          %v666 = vpack.c.b16 %v650, %v650
          %v667 = vpack.c.b16 %v651, %v651
          %v668 = vpack.c.b16 %v652, %v652
          %v669 = vpack.c.b16 %v653, %v653
          %v670 = vpack.c.b16 %v654, %v654
          %v671 = vpack.c.b16 %v655, %v655
          %v672 = vpack.c.b16 %v656, %v656
          %v673 = vpack.c.b16 %v657, %v657
          %v674 = vpack.c.b16 %v658, %v658
          %v675 = vpack.c.b16 %v659, %v659
          %v676 = vpack.c.b16 %v660, %v660
          %v677 = vpack.c.b16 %v661, %v661
          %v678 = vpack.c.b16 %v662, %v662
          %v679 = vpack.c.b16 %v663, %v663
          %v680 = vpack.c.b16 %v664, %v664
          %697 = vst [vmem:[%s289] sm:$0xf] %v665
          %698 = vst [vmem:[%s289 + $0x4] sm:$0xf] %v666
          %699 = vst [vmem:[%s289 + $0x8] sm:$0xf] %v667
          %700 = vst [vmem:[%s289 + $0xc] sm:$0xf] %v668
          %701 = vst [vmem:[%s289 + $0x10] sm:$0xf] %v669
          %702 = vst [vmem:[%s289 + $0x14] sm:$0xf] %v670
          %703 = vst [vmem:[%s289 + $0x18] sm:$0xf] %v671
          %704 = vst [vmem:[%s289 + $0x1c] sm:$0xf] %v672
          %705 = vst [vmem:[%s289 + $0x20] sm:$0xf] %v673
          %706 = vst [vmem:[%s289 + $0x24] sm:$0xf] %v674
          %707 = vst [vmem:[%s289 + $0x28] sm:$0xf] %v675
          %708 = vst [vmem:[%s289 + $0x2c] sm:$0xf] %v676
          %709 = vst [vmem:[%s289 + $0x30] sm:$0xf] %v677
          %710 = vst [vmem:[%s289 + $0x34] sm:$0xf] %v678
          %711 = vst [vmem:[%s289 + $0x38] sm:$0xf] %v679
          %712 = vst [vmem:[%s289 + $0x3c] sm:$0xf] %v680
        $region81: #{seal_gcn_forward.8} parent=68 // pred_fallthru
          _
        %s713 = smul.u32 16, %s18
        %p714 = scmp.lt.s32.totalorder %s713, 31
        %s715 = scalar_select %p714, %s713, 31
        %s716 = smul.addr %s715, 4
        %s717 = scalar_lea.vmem %s3, %s716
        // Predicated region
        $region82: #{seal_gcn_forward.8} parent=68 // pred_check
          %p718 = pneg %p114
        $region83: #{seal_gcn_forward.8} parent=68 // pred_check_branch
          %720 = sbr.rel (%p718) target = $region85
        $region84: #{seal_gcn_forward.8} parent=68 // pred_region
          %s721 = smul.u32 16, %s18
        $region85: #{seal_gcn_forward.8} parent=68 // pred_fallthru
          _
      $region69: #{seal_gcn_forward.8} parent=5 // pred_fallthru
        _
      %p722 = scmp.le.s32.totalorder 2, %s9
      // Predicated region
      $region86: #{seal_gcn_forward.8} parent=5 // pred_check
        %p723 = pneg %p722
      $region87: #{seal_gcn_forward.8} parent=5 // pred_check_branch
        %725 = sbr.rel (%p723) target = $region89
      $region88: #{seal_gcn_forward.8} parent=5 // pred_region
        %s726 = ssub.s32 %s9, 2
        // Predicated region
        $region90: #{seal_gcn_forward.8} parent=88 // pred_check
          %p727 = pneg %p120
        $region91: #{seal_gcn_forward.8} parent=88 // pred_check_branch
          %729 = sbr.rel (%p727) target = $region93
        $region92: #{seal_gcn_forward.8} parent=88 // pred_region
          %s730 = smul.u32 16, %s20
          %p731 = scmp.lt.s32.totalorder %s730, 31
          %s732 = scalar_select %p731, %s730, 31
          %s733 = smul.addr %s732, 4
          %s734 = scalar_lea.vmem %s3, %s733
        $region93: #{seal_gcn_forward.8} parent=88 // pred_fallthru
          _
      $region89: #{seal_gcn_forward.8} parent=5 // pred_fallthru
        _
    $region6: #{seal_gcn_forward.8} parent=1 // loop_footer
      %s13 = sadd.s32 1, %s9
    $region7: #{seal_gcn_forward.8} parent=1 // loop_footer_branch
      %8 = sbr.rel target = $region3
    $region8: #{seal_gcn_forward.8} parent=1 // loop_exit
      _

// kernel: seal_gcn_forward.9
$region0: #{seal_gcn_forward.9}
  #allocation0 [shape = 'u32[]', space=smem, size = 0x4, offset = 0x4, fixed_abs, tag = 'smem constant byte address 0x4 - core index']
  #allocation1 [shape = 'u32[144,128]{1,0:T(1,128)}', space=vmem, size = 0x12000, scoped, tag = 'internal scratch']
  #allocation2 [shape = 'f32[8,128]{1,0:T(8,128)}', space=vmem, size = 0x1000, scoped, tag = 'scratch operand']
  %s0 = inlined_call_operand.vmem [shape: bf16[8,256], index: 0, kind: input, shape index: {}]
  %s1 = inlined_call_operand.vmem [shape: bf16[256,128], index: 1, kind: input, shape index: {}]
  %s2 = inlined_call_operand.vmem [shape: bf16[128,128], index: 2, kind: input, shape index: {}]
  %s3 = inlined_call_operand.vmem [shape: f32[1,128], index: 3, kind: input, shape index: {}]
  %s4 = inlined_call_operand.vmem [shape: bf16[128,128], index: 4, kind: input, shape index: {}]
  %s5 = inlined_call_operand.vmem [shape: f32[1,128], index: 5, kind: input, shape index: {}]
  %s6 = inlined_call_operand.vmem [shape: f32[8,128], index: 6, kind: output, shape index: {}]
  %s7 = sld [smem:[#allocation0]]
  $region65: #{seal_gcn_forward.9} parent=0
    _
  %s9 = ssub.s32 1, %s7
  %s10 = scalar_select 0, %s9, %s7
  loop: start=0, step=1, limit=4
  $region2: #{seal_gcn_forward.9} parent=0 // loop_pre_header
    _
  $region3: #{seal_gcn_forward.9} parent=0 // loop_header
    %s12 = sphi 0, %s16
    %p13 = scmp.ge.s32.totalorder %s12, 4
    %s22 = sphi 0, %s24
    %s25 = sphi 0, %s22
    %s26 = sphi 0, %s25
    %s42 = sphi 0, %s26
    %s48 = sphi 0, %s50
    %s51 = sphi 0, %s48
    %s52 = sphi 0, %s51
    %s68 = sphi 0, %s52
    %s72 = sphi 0, %s72
    %s74 = sphi 0, %s72
    %s75 = sphi 0, %s74
    %s89 = sphi 0, %s75
    %s93 = sphi 0, %s93
    %s95 = sphi 0, %s93
    %s96 = sphi 0, %s95
    %s110 = sphi 0, %s96
    %s114 = sphi 0, %s114
    %s116 = sphi 0, %s114
    %s117 = sphi 0, %s116
    %s131 = sphi 0, %s117
    %s135 = sphi 0, %s135
    %s137 = sphi 0, %s135
    %s138 = sphi 0, %s137
    %s152 = sphi 0, %s138
    %s156 = sphi 0, %s156
    %s158 = sphi 0, %s156
    %s159 = sphi 0, %s158
    %s173 = sphi 0, %s159
  $region4: #{seal_gcn_forward.9} parent=0 // loop_header_branch
    %15 = sbr.rel (%p13) target = $region8
  $region5: #{seal_gcn_forward.9} parent=0 // loop_body
    %s17 = ssub.s32 %s12, 1
    %s18 = ssub.s32 %s12, 2
    %s19 = sadd.s32 %s12, 1
    %s20 = ssub.s32 %s12, %s19
    %p21 = scmp.eq.s32.totalorder %s20, 0
    %s23 = sadd.s32 %s22, 1
    %s24 = scalar_select %p21, %s22, %s23
    %p27 = pneg %p21
    %p28 = scmp.eq.s32.totalorder %s12, 1
    %p29 = por %p27, %p28
    %p30 = scmp.ne.s32.totalorder %s22, %s25
    %p31 = scmp.eq.s32.totalorder %s12, 0
    %p32 = por %p30, %p31
    %p33 = scmp.ne.s32.totalorder %s22, %s25
    %p34 = scmp.eq.s32.totalorder %s17, 1
    %p35 = por %p33, %p34
    %p36 = scmp.ne.s32.totalorder %s25, %s26
    %p37 = scmp.eq.s32.totalorder %s17, 0
    %p38 = por %p36, %p37
    %p39 = scmp.ne.s32.totalorder %s25, %s26
    %p40 = scmp.eq.s32.totalorder %s18, 1
    %p41 = por %p39, %p40
    %p43 = scmp.ne.s32.totalorder %s26, %s42
    %p44 = scmp.eq.s32.totalorder %s18, 0
    %p45 = por %p43, %p44
    %s46 = ssub.s32 %s12, %s19
    %p47 = scmp.eq.s32.totalorder %s46, 0
    %s49 = sadd.s32 %s48, 1
    %s50 = scalar_select %p47, %s48, %s49
    %p53 = pneg %p47
    %p54 = scmp.eq.s32.totalorder %s12, 1
    %p55 = por %p53, %p54
    %p56 = scmp.ne.s32.totalorder %s48, %s51
    %p57 = scmp.eq.s32.totalorder %s12, 0
    %p58 = por %p56, %p57
    %p59 = scmp.ne.s32.totalorder %s48, %s51
    %p60 = scmp.eq.s32.totalorder %s17, 1
    %p61 = por %p59, %p60
    %p62 = scmp.ne.s32.totalorder %s51, %s52
    %p63 = scmp.eq.s32.totalorder %s17, 0
    %p64 = por %p62, %p63
    %p65 = scmp.ne.s32.totalorder %s51, %s52
    %p66 = scmp.eq.s32.totalorder %s18, 1
    %p67 = por %p65, %p66
    %p69 = scmp.ne.s32.totalorder %s52, %s68
    %p70 = scmp.eq.s32.totalorder %s18, 0
    %p71 = por %p69, %p70
    %s73 = sadd.s32 %s72, 1
    %p76 = scmp.eq.s32.totalorder %s12, 1
    %p77 = scmp.ne.s32.totalorder %s72, %s74
    %p78 = scmp.eq.s32.totalorder %s12, 0
    %p79 = por %p77, %p78
    %p80 = scmp.ne.s32.totalorder %s72, %s74
    %p81 = scmp.eq.s32.totalorder %s17, 1
    %p82 = por %p80, %p81
    %p83 = scmp.ne.s32.totalorder %s74, %s75
    %p84 = scmp.eq.s32.totalorder %s17, 0
    %p85 = por %p83, %p84
    %p86 = scmp.ne.s32.totalorder %s74, %s75
    %p87 = scmp.eq.s32.totalorder %s18, 1
    %p88 = por %p86, %p87
    %p90 = scmp.ne.s32.totalorder %s75, %s89
    %p91 = scmp.eq.s32.totalorder %s18, 0
    %p92 = por %p90, %p91
    %s94 = sadd.s32 %s93, 1
    %p97 = scmp.eq.s32.totalorder %s12, 1
    %p98 = scmp.ne.s32.totalorder %s93, %s95
    %p99 = scmp.eq.s32.totalorder %s12, 0
    %p100 = por %p98, %p99
    %p101 = scmp.ne.s32.totalorder %s93, %s95
    %p102 = scmp.eq.s32.totalorder %s17, 1
    %p103 = por %p101, %p102
    %p104 = scmp.ne.s32.totalorder %s95, %s96
    %p105 = scmp.eq.s32.totalorder %s17, 0
    %p106 = por %p104, %p105
    %p107 = scmp.ne.s32.totalorder %s95, %s96
    %p108 = scmp.eq.s32.totalorder %s18, 1
    %p109 = por %p107, %p108
    %p111 = scmp.ne.s32.totalorder %s96, %s110
    %p112 = scmp.eq.s32.totalorder %s18, 0
    %p113 = por %p111, %p112
    %s115 = sadd.s32 %s114, 1
    %p118 = scmp.eq.s32.totalorder %s12, 1
    %p119 = scmp.ne.s32.totalorder %s114, %s116
    %p120 = scmp.eq.s32.totalorder %s12, 0
    %p121 = por %p119, %p120
    %p122 = scmp.ne.s32.totalorder %s114, %s116
    %p123 = scmp.eq.s32.totalorder %s17, 1
    %p124 = por %p122, %p123
    %p125 = scmp.ne.s32.totalorder %s116, %s117
    %p126 = scmp.eq.s32.totalorder %s17, 0
    %p127 = por %p125, %p126
    %p128 = scmp.ne.s32.totalorder %s116, %s117
    %p129 = scmp.eq.s32.totalorder %s18, 1
    %p130 = por %p128, %p129
    %p132 = scmp.ne.s32.totalorder %s117, %s131
    %p133 = scmp.eq.s32.totalorder %s18, 0
    %p134 = por %p132, %p133
    %s136 = sadd.s32 %s135, 1
    %p139 = scmp.eq.s32.totalorder %s12, 1
    %p140 = scmp.ne.s32.totalorder %s135, %s137
    %p141 = scmp.eq.s32.totalorder %s12, 0
    %p142 = por %p140, %p141
    %p143 = scmp.ne.s32.totalorder %s135, %s137
    %p144 = scmp.eq.s32.totalorder %s17, 1
    %p145 = por %p143, %p144
    %p146 = scmp.ne.s32.totalorder %s137, %s138
    %p147 = scmp.eq.s32.totalorder %s17, 0
    %p148 = por %p146, %p147
    %p149 = scmp.ne.s32.totalorder %s137, %s138
    %p150 = scmp.eq.s32.totalorder %s18, 1
    %p151 = por %p149, %p150
    %p153 = scmp.ne.s32.totalorder %s138, %s152
    %p154 = scmp.eq.s32.totalorder %s18, 0
    %p155 = por %p153, %p154
    %s157 = sadd.s32 %s156, 1
    %p160 = scmp.eq.s32.totalorder %s12, 1
    %p161 = scmp.ne.s32.totalorder %s156, %s158
    %p162 = scmp.eq.s32.totalorder %s12, 0
    %p163 = por %p161, %p162
    %p164 = scmp.ne.s32.totalorder %s156, %s158
    %p165 = scmp.eq.s32.totalorder %s17, 1
    %p166 = por %p164, %p165
    %p167 = scmp.ne.s32.totalorder %s158, %s159
    %p168 = scmp.eq.s32.totalorder %s17, 0
    %p169 = por %p167, %p168
    %p170 = scmp.ne.s32.totalorder %s158, %s159
    %p171 = scmp.eq.s32.totalorder %s18, 1
    %p172 = por %p170, %p171
    %p174 = scmp.ne.s32.totalorder %s159, %s173
    %p175 = scmp.eq.s32.totalorder %s18, 0
    %p176 = por %p174, %p175
    %p177 = scmp.le.s32.totalorder 1, %s12
    %p178 = scmp.lt.s32.totalorder %s12, 3
    %p179 = pnand %p177, %p178
    %p180 = pneg %p179
    // Predicated region
    $region9: #{seal_gcn_forward.9} parent=5 // pred_check
      _
    $region10: #{seal_gcn_forward.9} parent=5 // pred_check_branch
      %182 = sbr.rel (%p179) target = $region12
    $region11: #{seal_gcn_forward.9} parent=5 // pred_region
      %s183 = ssub.s32 %s12, 1
      // Predicated region
      $region13: #{seal_gcn_forward.9} parent=11 // pred_check
        %p184 = pneg %p85
      $region14: #{seal_gcn_forward.9} parent=11 // pred_check_branch
        %186 = sbr.rel (%p184) target = $region16
      $region15: #{seal_gcn_forward.9} parent=11 // pred_region
        _
      $region16: #{seal_gcn_forward.9} parent=11 // pred_fallthru
        _
      // Predicated region
      $region17: #{seal_gcn_forward.9} parent=11 // pred_check
        %p187 = pneg %p106
      $region18: #{seal_gcn_forward.9} parent=11 // pred_check_branch
        %189 = sbr.rel (%p187) target = $region20
      $region19: #{seal_gcn_forward.9} parent=11 // pred_region
        _
      $region20: #{seal_gcn_forward.9} parent=11 // pred_fallthru
        _
      // Predicated region
      $region21: #{seal_gcn_forward.9} parent=11 // pred_check
        %p190 = pneg %p127
      $region22: #{seal_gcn_forward.9} parent=11 // pred_check_branch
        %192 = sbr.rel (%p190) target = $region24
      $region23: #{seal_gcn_forward.9} parent=11 // pred_region
        _
      $region24: #{seal_gcn_forward.9} parent=11 // pred_fallthru
        _
      // Predicated region
      $region25: #{seal_gcn_forward.9} parent=11 // pred_check
        %p193 = pneg %p148
      $region26: #{seal_gcn_forward.9} parent=11 // pred_check_branch
        %195 = sbr.rel (%p193) target = $region28
      $region27: #{seal_gcn_forward.9} parent=11 // pred_region
        _
      $region28: #{seal_gcn_forward.9} parent=11 // pred_fallthru
        _
    $region12: #{seal_gcn_forward.9} parent=5 // pred_fallthru
      _
    %p196 = scmp.lt.s32.totalorder %s12, 2
    // Predicated region
    $region29: #{seal_gcn_forward.9} parent=5 // pred_check
      %p197 = pneg %p196
    $region30: #{seal_gcn_forward.9} parent=5 // pred_check_branch
      %199 = sbr.rel (%p197) target = $region32
    $region31: #{seal_gcn_forward.9} parent=5 // pred_region
      // Predicated region
      $region33: #{seal_gcn_forward.9} parent=31 // pred_check
        %p200 = pneg %p32
      $region34: #{seal_gcn_forward.9} parent=31 // pred_check_branch
        %202 = sbr.rel (%p200) target = $region36
      $region35: #{seal_gcn_forward.9} parent=31 // pred_region
        %p203 = scmp.lt.s32.totalorder %s12, 1
        %s204 = scalar_select %p203, %s12, 1
        %s205 = smul.addr %s204, 4
        %s206 = scalar_lea.vmem %s0, %s205
      $region36: #{seal_gcn_forward.9} parent=31 // pred_fallthru
        _
      // Predicated region
      $region37: #{seal_gcn_forward.9} parent=31 // pred_check
        %p207 = pneg %p58
      $region38: #{seal_gcn_forward.9} parent=31 // pred_check_branch
        %209 = sbr.rel (%p207) target = $region40
      $region39: #{seal_gcn_forward.9} parent=31 // pred_region
        %s210 = smul.u32 16, %s12
        %p211 = scmp.lt.s32.totalorder %s210, 31
        %s212 = scalar_select %p211, %s210, 31
        %s213 = smul.addr %s212, 4
        %s214 = scalar_lea.vmem %s1, %s213
        %s215 = smul.u32 16, %s12
      $region40: #{seal_gcn_forward.9} parent=31 // pred_fallthru
        _
    $region32: #{seal_gcn_forward.9} parent=5 // pred_fallthru
      _
    %p216 = scmp.le.s32.totalorder 1, %s12
    %p217 = scmp.lt.s32.totalorder %s12, 3
    %p218 = pnand %p216, %p217
    %p219 = pneg %p218
    // Predicated region
    $region41: #{seal_gcn_forward.9} parent=5 // pred_check
      _
    $region42: #{seal_gcn_forward.9} parent=5 // pred_check_branch
      %221 = sbr.rel (%p218) target = $region44
    $region43: #{seal_gcn_forward.9} parent=5 // pred_region
      %s222 = ssub.s32 %s12, 1
      %p223 = scmp.lt.s32.totalorder %s17, 1
      %s224 = scalar_select %p223, %s17, 1
      %s225 = smul.addr %s224, 4
      %s226 = scalar_lea.vmem %s0, %s225
      %p227 = pneg %p38
      %p228 = pneg %p35
      %s229 = smul.u32 16, %s17
      %p230 = scmp.lt.s32.totalorder %s229, 31
      %s231 = scalar_select %p230, %s229, 31
      %s232 = smul.addr %s231, 4
      %s233 = scalar_lea.vmem %s1, %s232
      %p234 = pneg %p64
      %p235 = pneg %p61
      %p236 = pneg %p85
      %p237 = pneg %p82
      %p238 = pneg %p106
      %p239 = pneg %p103
      %p240 = pneg %p127
      %p241 = pneg %p124
      %p242 = pneg %p148
      %p243 = pneg %p145
      %p244 = pneg %p169
      %p245 = pneg %p166
      %p246 = scmp.lt.s32.totalorder %s17, 1
      %s247 = scalar_select %p246, %s17, 1
      %s248 = smul.addr %s247, 4
      %s249 = scalar_lea.vmem %s0, %s248
      %s250 = smul.u32 16, %s17
      %p251 = scmp.lt.s32.totalorder %s250, 31
      %s252 = scalar_select %p251, %s250, 31
      %s253 = smul.addr %s252, 4
      %s254 = scalar_lea.vmem %s1, %s253
      %s255 = smul.u32 16, %s17
      %p257 = scmp.eq.s32.totalorder %s17, 0
      // Predicated region
      $region45: #{seal_gcn_forward.9} parent=43 // pred_check
        %p258 = pneg %p257
      $region46: #{seal_gcn_forward.9} parent=43 // pred_check_branch
        %260 = sbr.rel (%p258) target = $region48
      $region47: #{seal_gcn_forward.9} parent=43 // pred_region
        %261 = vst [vmem:[#allocation2] sm:$0xff] 0.0
      $region48: #{seal_gcn_forward.9} parent=43 // pred_fallthru
        _
      %v262 = vld [vmem:[#allocation2] sm:$0xff]
      %v263 = vld [vmem:[%s249] sm:$0xf]
      %v264 = vld [vmem:[%s254] sm:$0xf]
      %v265 = vld [vmem:[%s254 + $0x4] sm:$0xf]
      %v266 = vld [vmem:[%s254 + $0x8] sm:$0xf]
      %v267 = vld [vmem:[%s254 + $0xc] sm:$0xf]
      %v268 = vld [vmem:[%s254 + $0x10] sm:$0xf]
      %v269 = vld [vmem:[%s254 + $0x14] sm:$0xf]
      %v270 = vld [vmem:[%s254 + $0x18] sm:$0xf]
      %v271 = vld [vmem:[%s254 + $0x1c] sm:$0xf]
      %v272 = vld [vmem:[%s254 + $0x20] sm:$0xf]
      %v273 = vld [vmem:[%s254 + $0x24] sm:$0xf]
      %v274 = vld [vmem:[%s254 + $0x28] sm:$0xf]
      %v275 = vld [vmem:[%s254 + $0x2c] sm:$0xf]
      %v276 = vld [vmem:[%s254 + $0x30] sm:$0xf]
      %v277 = vld [vmem:[%s254 + $0x34] sm:$0xf]
      %v278 = vld [vmem:[%s254 + $0x38] sm:$0xf]
      %v279 = vld [vmem:[%s254 + $0x3c] sm:$0xf]
      %v296 = vunpack.c.l.b16 %v264
      %v297 = vunpack.c.l.b16 %v265
      %v298 = vunpack.c.l.b16 %v266
      %v299 = vunpack.c.l.b16 %v267
      %v300 = vunpack.c.l.b16 %v268
      %v301 = vunpack.c.l.b16 %v269
      %v302 = vunpack.c.l.b16 %v270
      %v303 = vunpack.c.l.b16 %v271
      %v304 = vunpack.c.l.b16 %v272
      %v305 = vunpack.c.l.b16 %v273
      %v306 = vunpack.c.l.b16 %v274
      %v307 = vunpack.c.l.b16 %v275
      %v308 = vunpack.c.l.b16 %v276
      %v309 = vunpack.c.l.b16 %v277
      %v310 = vunpack.c.l.b16 %v278
      %v311 = vunpack.c.l.b16 %v279
      %v312 = vpack.c.b16 %v297, %v296
      %v313 = vpack.c.b16 %v299, %v298
      %v314 = vpack.c.b16 %v301, %v300
      %v315 = vpack.c.b16 %v303, %v302
      %v316 = vpack.c.b16 %v305, %v304
      %v317 = vpack.c.b16 %v307, %v306
      %v318 = vpack.c.b16 %v309, %v308
      %v319 = vpack.c.b16 %v311, %v310
      %328 = vmatprep.subr.bf16.mxu0 0
      %329 = vmatpush1.bf16.msra.mxu0 %v312
      %330 = vmatprep.subr.bf16.mxu0 0
      %331 = vmatpush1.bf16.msra.mxu0 %v313
      %332 = vmatprep.subr.bf16.mxu0 0
      %333 = vmatpush1.bf16.msra.mxu0 %v314
      %334 = vmatprep.subr.bf16.mxu0 0
      %335 = vmatpush1.bf16.msra.mxu0 %v315
      %336 = vmatprep.subr.bf16.mxu0 0
      %337 = vmatpush1.bf16.msra.mxu0 %v316
      %338 = vmatprep.subr.bf16.mxu0 0
      %339 = vmatpush1.bf16.msra.mxu0 %v317
      %340 = vmatprep.subr.bf16.mxu0 0
      %341 = vmatpush1.bf16.msra.mxu0 %v318
      %342 = vmatprep.subr.bf16.mxu0 0
      %343 = vmatpush1.bf16.msra.mxu0 %v319
      %344 = vmatprep.subr.bf16.mxu0 0
      %345 = vmatpush1.bf16.msra.mxu0 0
      %346 = vmatprep.subr.bf16.mxu0 0
      %347 = vmatpush1.bf16.msra.mxu0 0
      %348 = vmatprep.subr.bf16.mxu0 0
      %349 = vmatpush1.bf16.msra.mxu0 0
      %350 = vmatprep.subr.bf16.mxu0 0
      %351 = vmatpush1.bf16.msra.mxu0 0
      %352 = vmatprep.subr.bf16.mxu0 0
      %353 = vmatpush1.bf16.msra.mxu0 0
      %354 = vmatprep.subr.bf16.mxu0 0
      %355 = vmatpush1.bf16.msra.mxu0 0
      %356 = vmatprep.subr.bf16.mxu0 0
      %357 = vmatpush1.bf16.msra.mxu0 0
      %358 = vmatprep.subr.bf16.mxu0 0
      %359 = vmatpush1.bf16.msra.mxu0 0
      %360 = vmatprep.mubr.bf16.mxu0 0
      %361 = vmatmul.mubr.bf16.gmra.mrb[0].mxu0 %v263
      %v362 = vpop.f32.mrb[0].mxu0
      %v363 = vadd.f32 0.0, %v362
      %v364 = vpop.f32.mrb[0].mxu0
      %v365 = vpop.f32.mrb[0].mxu0
      %v366 = vpop.f32.mrb[0].mxu0
      %367 = vdwg.mxu0
      %v368 = vadd.f32 %v262, %v363
      %369 = vst [vmem:[#allocation2] sm:$0xff] %v368
      %p370 = scmp.eq.s32.totalorder %s17, 1
      // Predicated region
      $region49: #{seal_gcn_forward.9} parent=43 // pred_check
        %p371 = pneg %p370
      $region50: #{seal_gcn_forward.9} parent=43 // pred_check_branch
        %373 = sbr.rel (%p371) target = $region52
      $region51: #{seal_gcn_forward.9} parent=43 // pred_region
        %v374 = vld [vmem:[#allocation2] sm:$0xff]
        %v375 = vpack.c.bf16 %v374, %v374
        %v376 = vld [vmem:[%s2] sm:$0xf]
        %v377 = vld [vmem:[%s2 + $0x4] sm:$0xf]
        %v378 = vld [vmem:[%s2 + $0x8] sm:$0xf]
        %v379 = vld [vmem:[%s2 + $0xc] sm:$0xf]
        %v380 = vld [vmem:[%s2 + $0x10] sm:$0xf]
        %v381 = vld [vmem:[%s2 + $0x14] sm:$0xf]
        %v382 = vld [vmem:[%s2 + $0x18] sm:$0xf]
        %v383 = vld [vmem:[%s2 + $0x1c] sm:$0xf]
        %v384 = vld [vmem:[%s2 + $0x20] sm:$0xf]
        %v385 = vld [vmem:[%s2 + $0x24] sm:$0xf]
        %v386 = vld [vmem:[%s2 + $0x28] sm:$0xf]
        %v387 = vld [vmem:[%s2 + $0x2c] sm:$0xf]
        %v388 = vld [vmem:[%s2 + $0x30] sm:$0xf]
        %v389 = vld [vmem:[%s2 + $0x34] sm:$0xf]
        %v390 = vld [vmem:[%s2 + $0x38] sm:$0xf]
        %v391 = vld [vmem:[%s2 + $0x3c] sm:$0xf]
        %v392 = vld [vmem:[%s3] sm:$0x1]
        %v394 = vlaneseq
        %v395 = vshrl.u32 %v394, 7
        %v396 = vsub.s32 0, %v395
        %v397 = vrot.slane %v392, %v396
        %v415 = vunpack.c.l.b16 %v376
        %v416 = vunpack.c.l.b16 %v377
        %v417 = vunpack.c.l.b16 %v378
        %v418 = vunpack.c.l.b16 %v379
        %v419 = vunpack.c.l.b16 %v380
        %v420 = vunpack.c.l.b16 %v381
        %v421 = vunpack.c.l.b16 %v382
        %v422 = vunpack.c.l.b16 %v383
        %v423 = vunpack.c.l.b16 %v384
        %v424 = vunpack.c.l.b16 %v385
        %v425 = vunpack.c.l.b16 %v386
        %v426 = vunpack.c.l.b16 %v387
        %v427 = vunpack.c.l.b16 %v388
        %v428 = vunpack.c.l.b16 %v389
        %v429 = vunpack.c.l.b16 %v390
        %v430 = vunpack.c.l.b16 %v391
        %v431 = vpack.c.b16 %v416, %v415
        %v432 = vpack.c.b16 %v418, %v417
        %v433 = vpack.c.b16 %v420, %v419
        %v434 = vpack.c.b16 %v422, %v421
        %v435 = vpack.c.b16 %v424, %v423
        %v436 = vpack.c.b16 %v426, %v425
        %v437 = vpack.c.b16 %v428, %v427
        %v438 = vpack.c.b16 %v430, %v429
        %447 = vmatprep.subr.bf16.mxu0 0
        %448 = vmatpush1.bf16.msra.mxu0 %v431
        %449 = vmatprep.subr.bf16.mxu0 0
        %450 = vmatpush1.bf16.msra.mxu0 %v432
        %451 = vmatprep.subr.bf16.mxu0 0
        %452 = vmatpush1.bf16.msra.mxu0 %v433
        %453 = vmatprep.subr.bf16.mxu0 0
        %454 = vmatpush1.bf16.msra.mxu0 %v434
        %455 = vmatprep.subr.bf16.mxu0 0
        %456 = vmatpush1.bf16.msra.mxu0 %v435
        %457 = vmatprep.subr.bf16.mxu0 0
        %458 = vmatpush1.bf16.msra.mxu0 %v436
        %459 = vmatprep.subr.bf16.mxu0 0
        %460 = vmatpush1.bf16.msra.mxu0 %v437
        %461 = vmatprep.subr.bf16.mxu0 0
        %462 = vmatpush1.bf16.msra.mxu0 %v438
        %463 = vmatprep.subr.bf16.mxu0 0
        %464 = vmatpush1.bf16.msra.mxu0 0
        %465 = vmatprep.subr.bf16.mxu0 0
        %466 = vmatpush1.bf16.msra.mxu0 0
        %467 = vmatprep.subr.bf16.mxu0 0
        %468 = vmatpush1.bf16.msra.mxu0 0
        %469 = vmatprep.subr.bf16.mxu0 0
        %470 = vmatpush1.bf16.msra.mxu0 0
        %471 = vmatprep.subr.bf16.mxu0 0
        %472 = vmatpush1.bf16.msra.mxu0 0
        %473 = vmatprep.subr.bf16.mxu0 0
        %474 = vmatpush1.bf16.msra.mxu0 0
        %475 = vmatprep.subr.bf16.mxu0 0
        %476 = vmatpush1.bf16.msra.mxu0 0
        %477 = vmatprep.subr.bf16.mxu0 0
        %478 = vmatpush1.bf16.msra.mxu0 0
        %479 = vmatprep.mubr.bf16.mxu0 0
        %480 = vmatmul.mubr.bf16.gmra.mrb[0].mxu0 %v375
        %v481 = vpop.f32.mrb[0].mxu0
        %v482 = vadd.f32 %v397, %v481
        %v483 = vpop.f32.mrb[0].mxu0
        %v484 = vpop.f32.mrb[0].mxu0
        %v485 = vpop.f32.mrb[0].mxu0
        %486 = vdwg.mxu0
        %v487 = vmax.f32 %v482, 0.0
        %v488 = vpack.c.bf16 %v487, %v487
        %v489 = vld [vmem:[%s4] sm:$0xf]
        %v490 = vld [vmem:[%s4 + $0x4] sm:$0xf]
        %v491 = vld [vmem:[%s4 + $0x8] sm:$0xf]
        %v492 = vld [vmem:[%s4 + $0xc] sm:$0xf]
        %v493 = vld [vmem:[%s4 + $0x10] sm:$0xf]
        %v494 = vld [vmem:[%s4 + $0x14] sm:$0xf]
        %v495 = vld [vmem:[%s4 + $0x18] sm:$0xf]
        %v496 = vld [vmem:[%s4 + $0x1c] sm:$0xf]
        %v497 = vld [vmem:[%s4 + $0x20] sm:$0xf]
        %v498 = vld [vmem:[%s4 + $0x24] sm:$0xf]
        %v499 = vld [vmem:[%s4 + $0x28] sm:$0xf]
        %v500 = vld [vmem:[%s4 + $0x2c] sm:$0xf]
        %v501 = vld [vmem:[%s4 + $0x30] sm:$0xf]
        %v502 = vld [vmem:[%s4 + $0x34] sm:$0xf]
        %v503 = vld [vmem:[%s4 + $0x38] sm:$0xf]
        %v504 = vld [vmem:[%s4 + $0x3c] sm:$0xf]
        %v505 = vld [vmem:[%s5] sm:$0x1]
        %v507 = vlaneseq
        %v508 = vshrl.u32 %v507, 7
        %v509 = vsub.s32 0, %v508
        %v510 = vrot.slane %v505, %v509
        %v528 = vunpack.c.l.b16 %v489
        %v529 = vunpack.c.l.b16 %v490
        %v530 = vunpack.c.l.b16 %v491
        %v531 = vunpack.c.l.b16 %v492
        %v532 = vunpack.c.l.b16 %v493
        %v533 = vunpack.c.l.b16 %v494
        %v534 = vunpack.c.l.b16 %v495
        %v535 = vunpack.c.l.b16 %v496
        %v536 = vunpack.c.l.b16 %v497
        %v537 = vunpack.c.l.b16 %v498
        %v538 = vunpack.c.l.b16 %v499
        %v539 = vunpack.c.l.b16 %v500
        %v540 = vunpack.c.l.b16 %v501
        %v541 = vunpack.c.l.b16 %v502
        %v542 = vunpack.c.l.b16 %v503
        %v543 = vunpack.c.l.b16 %v504
        %v544 = vpack.c.b16 %v529, %v528
        %v545 = vpack.c.b16 %v531, %v530
        %v546 = vpack.c.b16 %v533, %v532
        %v547 = vpack.c.b16 %v535, %v534
        %v548 = vpack.c.b16 %v537, %v536
        %v549 = vpack.c.b16 %v539, %v538
        %v550 = vpack.c.b16 %v541, %v540
        %v551 = vpack.c.b16 %v543, %v542
        %560 = vmatprep.subr.bf16.mxu0 0
        %561 = vmatpush1.bf16.msra.mxu0 %v544
        %562 = vmatprep.subr.bf16.mxu0 0
        %563 = vmatpush1.bf16.msra.mxu0 %v545
        %564 = vmatprep.subr.bf16.mxu0 0
        %565 = vmatpush1.bf16.msra.mxu0 %v546
        %566 = vmatprep.subr.bf16.mxu0 0
        %567 = vmatpush1.bf16.msra.mxu0 %v547
        %568 = vmatprep.subr.bf16.mxu0 0
        %569 = vmatpush1.bf16.msra.mxu0 %v548
        %570 = vmatprep.subr.bf16.mxu0 0
        %571 = vmatpush1.bf16.msra.mxu0 %v549
        %572 = vmatprep.subr.bf16.mxu0 0
        %573 = vmatpush1.bf16.msra.mxu0 %v550
        %574 = vmatprep.subr.bf16.mxu0 0
        %575 = vmatpush1.bf16.msra.mxu0 %v551
        %576 = vmatprep.subr.bf16.mxu0 0
        %577 = vmatpush1.bf16.msra.mxu0 0
        %578 = vmatprep.subr.bf16.mxu0 0
        %579 = vmatpush1.bf16.msra.mxu0 0
        %580 = vmatprep.subr.bf16.mxu0 0
        %581 = vmatpush1.bf16.msra.mxu0 0
        %582 = vmatprep.subr.bf16.mxu0 0
        %583 = vmatpush1.bf16.msra.mxu0 0
        %584 = vmatprep.subr.bf16.mxu0 0
        %585 = vmatpush1.bf16.msra.mxu0 0
        %586 = vmatprep.subr.bf16.mxu0 0
        %587 = vmatpush1.bf16.msra.mxu0 0
        %588 = vmatprep.subr.bf16.mxu0 0
        %589 = vmatpush1.bf16.msra.mxu0 0
        %590 = vmatprep.subr.bf16.mxu0 0
        %591 = vmatpush1.bf16.msra.mxu0 0
        %592 = vmatprep.mubr.bf16.mxu0 0
        %593 = vmatmul.mubr.bf16.gmra.mrb[0].mxu0 %v488
        %v594 = vpop.f32.mrb[0].mxu0
        %v595 = vadd.f32 %v510, %v594
        %v596 = vpop.f32.mrb[0].mxu0
        %v597 = vpop.f32.mrb[0].mxu0
        %v598 = vpop.f32.mrb[0].mxu0
        %599 = vdwg.mxu0
        %600 = vst [vmem:[%s6] sm:$0xff] %v595
      $region52: #{seal_gcn_forward.9} parent=43 // pred_fallthru
        _
      // Predicated region
      $region53: #{seal_gcn_forward.9} parent=43 // pred_check
        %p601 = pneg %p166
      $region54: #{seal_gcn_forward.9} parent=43 // pred_check_branch
        %603 = sbr.rel (%p601) target = $region56
      $region55: #{seal_gcn_forward.9} parent=43 // pred_region
        _
      $region56: #{seal_gcn_forward.9} parent=43 // pred_fallthru
        _
      // Predicated region
      $region57: #{seal_gcn_forward.9} parent=43 // pred_check
        %p604 = pneg %p166
      $region58: #{seal_gcn_forward.9} parent=43 // pred_check_branch
        %606 = sbr.rel (%p604) target = $region60
      $region59: #{seal_gcn_forward.9} parent=43 // pred_region
        _
      $region60: #{seal_gcn_forward.9} parent=43 // pred_fallthru
        _
    $region44: #{seal_gcn_forward.9} parent=5 // pred_fallthru
      _
    %p607 = scmp.le.s32.totalorder 2, %s12
    // Predicated region
    $region61: #{seal_gcn_forward.9} parent=5 // pred_check
      %p608 = pneg %p607
    $region62: #{seal_gcn_forward.9} parent=5 // pred_check_branch
      %610 = sbr.rel (%p608) target = $region64
    $region63: #{seal_gcn_forward.9} parent=5 // pred_region
      %s611 = ssub.s32 %s12, 2
    $region64: #{seal_gcn_forward.9} parent=5 // pred_fallthru
      _
  $region6: #{seal_gcn_forward.9} parent=0 // loop_footer
    %s16 = sadd.s32 1, %s12
  $region7: #{seal_gcn_forward.9} parent=0 // loop_footer_branch
    %11 = sbr.rel target = $region3
  $region8: #{seal_gcn_forward.9} parent=0 // loop_exit
    _

</llo_original>
